<compile_context>
chip_gen: v7x
topology: tpu7x:2x2x1
jax: 0.10.0
libtpu: 0.0.40
codegen_flags: <defaults>
</compile_context>

<pallas_src>
import math

import jax
import jax.numpy as jnp
from jax.experimental import pallas as pl
from jax.experimental.pallas import tpu as pltpu

HIDDEN = 512        # classifier_deep.fc1 output width (fixed by the module)
LANE = 128
ROW_TILE = 16       # bf16 packs 2 rows per sublane -> round row tiles to 16


def _round_up(x, m):
    return (x + m - 1) // m * m


def _tpu_vmem_bytes():
    try:
        return int(pltpu.get_tpu_info().vmem_capacity_bytes)
    except Exception:
        return 64 << 20          # v7x per-TC VMEM; safe lower bound everywhere


def _tm_max():
    try:
        kind = jax.devices()[0].device_kind.lower()
    except Exception:
        kind = ""
    # v5e MXUs are 128x128; v6e/v7x are 256x256 -> feed them at the native edge.
    return 128 if "v5" in kind else 256


# ----------------------------------------------------------------------------- kernels
def coal_forward_fused_kernel(x_ref, wf_ref, bf_ref, w1_ref, b1_ref, w2_ref, o_ref):
    """Single-K-tile path: the whole featurizer weight is VMEM-resident, so the
    entire forward (featurizer + fc1 + gradient-reverse(identity) + fc2) runs in
    one grid step per batch tile.  bf16 MXU operands, f32 accumulation."""
    feat = jnp.dot(x_ref[...].astype(jnp.bfloat16), wf_ref[...],
                   preferred_element_type=jnp.float32) + bf_ref[...]
    h = jnp.dot(feat.astype(jnp.bfloat16), w1_ref[...],
                preferred_element_type=jnp.float32) + b1_ref[...]
    # GradientReverseLayer: forward is identity (coeff/eta only scale gradients).
    o_ref[...] = jnp.dot(h.astype(jnp.bfloat16), w2_ref[...],
                         preferred_element_type=jnp.float32)


def coal_forward_streamed_kernel(x_ref, wf_ref, bf_ref, w1_ref, b1_ref, w2_ref,
                                 o_ref, acc_ref):
    """Streamed-K path (featurizer weight too large for VMEM): accumulate the
    featurizer matmul in an f32 scratch across K tiles, run the classifier once
    in the k == last finalize block."""
    k = pl.program_id(1)

    @pl.when(k == 0)
    def _init():
        acc_ref[...] = jnp.zeros_like(acc_ref)

    acc_ref[...] += jnp.dot(x_ref[...].astype(jnp.bfloat16), wf_ref[...],
                            preferred_element_type=jnp.float32)

    @pl.when(k == pl.num_programs(1) - 1)
    def _finalize():
        acc_ref[...] += bf_ref[...]                                   # in-place bias add
        h = jnp.dot(acc_ref[...].astype(jnp.bfloat16), w1_ref[...],
                    preferred_element_type=jnp.float32) + b1_ref[...]
        # GradientReverseLayer forward == identity.
        o_ref[...] = jnp.dot(h.astype(jnp.bfloat16), w2_ref[...],
                             preferred_element_type=jnp.float32)


# ----------------------------------------------------------------------------- params
def init_params(key, in_features, d_out, num_classes):
    """Deterministic init mimicking nn.Linear default (uniform +-1/sqrt(fan_in)),
    stored in PyTorch [out, in] layout (used only by the f32 reference)."""
    k = jax.random.split(key, 5)

    def lin_w(kk, fan_in, fan_out):
        bound = 1.0 / math.sqrt(fan_in)
        return jax.random.uniform(kk, (fan_out, fan_in), jnp.float32, -bound, bound)

    def lin_b(kk, fan_in, fan_out):
        bound = 1.0 / math.sqrt(fan_in)
        return jax.random.uniform(kk, (fan_out,), jnp.float32, -bound, bound)

    return {
        "wf": lin_w(k[0], in_features, d_out),   # synthetic featurizer Linear
        "bf": lin_b(k[1], in_features, d_out),
        "w1": lin_w(k[2], d_out, HIDDEN),        # classifier_deep.fc1
        "b1": lin_b(k[3], d_out, HIDDEN),
        "w2": lin_w(k[4], HIDDEN, num_classes),  # classifier_deep.fc2 (no bias)
    }


def prepare_inference_params(params, num_classes):
    """One-time packing (NOT in the per-call path):
      - transpose weights to [in, out] so the MXU consumes them directly,
      - cast matmul operands to bf16 (biases stay f32),
      - pad d_out / num_classes to lane (128) multiples (lane-dense stores),
      - pick the largest featurizer K tile that fits the per-generation VMEM
        budget (full K if possible -> fused kernel) and pad K accordingly.
    """
    wf_t = params["wf"].T            # [K, d_out]
    w1_t = params["w1"].T            # [d_out, 512]
    w2_t = params["w2"].T            # [512, num_classes]
    K, d_out = wf_t.shape

    D_pad = _round_up(d_out, LANE)
    N_pad = _round_up(num_classes, LANE)
    K_lane = _round_up(K, LANE)

    tm_max = _tm_max()
    phys_vmem = _tpu_vmem_bytes()
    budget = int(0.55 * phys_vmem)   # ~35 MiB on v7x, ~70 MiB on v5e/v6e

    def footprint(tk):
        # Conservative: count every input block double-buffered.
        b = 2 * tm_max * tk * 4             # x tiles (f32, cast in-kernel)
        b += 2 * tk * D_pad * 2             # wf tiles (bf16)
        b += 2 * D_pad * 4                  # bf (f32)
        b += 2 * D_pad * HIDDEN * 2         # w1 (bf16, resident)
        b += 2 * HIDDEN * 4                 # b1 (f32)
        b += 2 * HIDDEN * N_pad * 2         # w2 (bf16, resident)
        b += 2 * tm_max * N_pad * 4         # output block (f32)
        b += tm_max * D_pad * 4             # f32 accumulator scratch (streamed path)
        return b

    tk = LANE
    for cand in [K_lane] + [t for t in (4096, 2048, 1024, 512, 256, 128) if t < K_lane]:
        if footprint(cand) <= budget:
            tk = cand
            break

    K_pad = _round_up(K, tk)
    vmem_limit = int(min(phys_vmem - (8 << 20),
                         max(budget, int(1.25 * footprint(tk)))))

    def pad2(a, rows, cols, dtype):
        out = jnp.zeros((rows, cols), dtype)
        return out.at[: a.shape[0], : a.shape[1]].set(a.astype(dtype))

    return {
        "wf": pad2(wf_t, K_pad, D_pad, jnp.bfloat16),
        "bf": pad2(params["bf"][None, :], 1, D_pad, jnp.float32),
        "w1": pad2(w1_t, D_pad, HIDDEN, jnp.bfloat16),
        "b1": pad2(params["b1"][None, :], 1, HIDDEN, jnp.float32),
        "w2": pad2(w2_t, HIDDEN, N_pad, jnp.bfloat16),
        "num_classes": num_classes,
        "in_features": K,
        "tk": tk,
        "tm_max": tm_max,
        "vmem_limit": vmem_limit,
    }


# ----------------------------------------------------------------------------- wrapper
def coal_network_forward(x_nchw, kparams, *, coeff=1.0, reverse=False):
    """COALNetwork.forward(input, coeff, reverse) -> y_pred [B, num_classes]."""
    del coeff, reverse  # only affect gradients; forward values are unchanged

    wf, bf = kparams["wf"], kparams["bf"]
    w1, b1 = kparams["w1"], kparams["b1"]
    w2 = kparams["w2"]
    num_classes = kparams["num_classes"]
    K = kparams["in_features"]
    tk = kparams["tk"]
    tm_max = kparams["tm_max"]
    vmem_limit = kparams["vmem_limit"]

    K_pad, D_pad = wf.shape
    N_pad = w2.shape[1]
    nk = K_pad // tk

    B = x_nchw.shape[0]
    if B <= ROW_TILE:
        tm = _round_up(B, ROW_TILE)
    else:
        # ceil(B/2) so the "parallel" batch axis has >=2 tiles (both v7x TCs busy),
        # capped at the MXU edge (128 on v5e, 256 on v6e/v7x).
        tm = min(tm_max, _round_up(-(-B // 2), ROW_TILE))
    B_pad = _round_up(B, tm)
    nb = B_pad // tm

    # x streamed in its native dtype (cast to bf16 on the VPU inside the kernel);
    # only materialize a padded copy when padding is actually required.
    x_flat = x_nchw.reshape(B, -1)
    if B_pad != B or K_pad != K:
        x_p = jnp.zeros((B_pad, K_pad), x_flat.dtype).at[:B, :K].set(x_flat)
    else:
        x_p = x_flat

    wf_reads = 1 if nk == 1 else nb   # streamed wf is re-fetched once per batch tile
    cost = pl.CostEstimate(
        flops=2 * B_pad * (K_pad * D_pad + D_pad * HIDDEN + HIDDEN * N_pad),
        transcendentals=0,
        bytes_accessed=int(
            x_p.size * x_p.dtype.itemsize
            + wf_reads * wf.size * 2 + w1.size * 2 + w2.size * 2
            + bf.size * 4 + b1.size * 4 + B_pad * N_pad * 4),
    )

    if nk == 1:
        # Featurizer weight fully VMEM-resident -> fused single-step kernel.
        grid_spec = pltpu.PrefetchScalarGridSpec(
            num_scalar_prefetch=0,
            grid=(nb,),
            in_specs=[
                pl.BlockSpec((tm, K_pad), lambda i: (i, 0)),         # x: batch tiles
                pl.BlockSpec((K_pad, D_pad), lambda i: (0, 0)),      # wf: resident
                pl.BlockSpec((1, D_pad), lambda i: (0, 0)),          # bf: resident
                pl.BlockSpec((D_pad, HIDDEN), lambda i: (0, 0)),     # w1: resident
                pl.BlockSpec((1, HIDDEN), lambda i: (0, 0)),         # b1: resident
                pl.BlockSpec((HIDDEN, N_pad), lambda i: (0, 0)),     # w2: resident
            ],
            out_specs=pl.BlockSpec((tm, N_pad), lambda i: (i, 0)),
        )
        out_padded = pl.pallas_call(
            coal_forward_fused_kernel,
            out_shape=jax.ShapeDtypeStruct((B_pad, N_pad), jnp.float32),
            grid_spec=grid_spec,
            compiler_params=pltpu.CompilerParams(
                dimension_semantics=("parallel",),
                vmem_limit_bytes=vmem_limit),
            cost_estimate=cost,
        )(x_p, wf, bf, w1, b1, w2)
    else:
        # TODO(synk): when wf cannot be VMEM-resident and nb > 1, a serpentine K
        # order (or K-outer grid with a resident accumulator) would stream wf
        # exactly once instead of nb times.
        grid_spec = pltpu.PrefetchScalarGridSpec(
            num_scalar_prefetch=0,
            grid=(nb, nk),                                           # K (reduction) innermost
            in_specs=[
                pl.BlockSpec((tm, tk), lambda i, k: (i, k)),         # x: streamed tiles
                pl.BlockSpec((tk, D_pad), lambda i, k: (k, 0)),      # wf: streamed K tiles
                pl.BlockSpec((1, D_pad), lambda i, k: (0, 0)),       # bf: resident
                pl.BlockSpec((D_pad, HIDDEN), lambda i, k: (0, 0)),  # w1: resident
                pl.BlockSpec((1, HIDDEN), lambda i, k: (0, 0)),      # b1: resident
                pl.BlockSpec((HIDDEN, N_pad), lambda i, k: (0, 0)),  # w2: resident
            ],
            out_specs=pl.BlockSpec((tm, N_pad), lambda i, k: (i, 0)),
            scratch_shapes=[pltpu.VMEM((tm, D_pad), jnp.float32)],   # featurizer accumulator
        )
        out_padded = pl.pallas_call(
            coal_forward_streamed_kernel,
            out_shape=jax.ShapeDtypeStruct((B_pad, N_pad), jnp.float32),
            grid_spec=grid_spec,
            compiler_params=pltpu.CompilerParams(
                dimension_semantics=("parallel", "arbitrary"),
                vmem_limit_bytes=vmem_limit),
            cost_estimate=cost,
        )(x_p, wf, bf, w1, b1, w2)

    return out_padded[:B, :num_classes]


# ----------------------------------------------------------------------------- reference
def reference_forward(x_nchw, params):
    x = x_nchw.reshape(x_nchw.shape[0], -1).astype(jnp.float32)
    feat = x @ params["wf"].T + params["bf"]
    h = feat @ params["w1"].T + params["b1"]
    return h @ params["w2"].T


if __name__ == "__main__":
    B, C, H, W = 2, 4, 16, 16          # NCHW input
    d_out = 256                        # featurizer.d_out (== classifier inc)
    num_classes = 16

    key = jax.random.PRNGKey(0)
    kx, kp = jax.random.split(key)
    x = jax.random.normal(kx, (B, C, H, W), jnp.float32)

    params = init_params(kp, C * H * W, d_out, num_classes)
    kparams = prepare_inference_params(params, num_classes)   # one-time packing

    y = coal_network_forward(x, kparams, coeff=1.0, reverse=False)
    y = jax.block_until_ready(y)

    y_ref = reference_forward(x, params)
    assert y.shape == (B, num_classes)
    # bf16 MXU operands (f32 accumulation) vs f32 reference -> loosened tolerance.
    assert jnp.allclose(y, y_ref, atol=5e-2, rtol=5e-2), float(jnp.max(jnp.abs(y - y_ref)))
    print("KERNEL_OK")
</pallas_src>

<mosaic_0001>
module attributes {stable_mosaic.version = 11 : i64} {
  func.func @coal_forward_fused_kernel(%arg0: i32, %arg1: memref<16x1024xf32, #tpu.memory_space<vmem>>, %arg2: memref<1024x256xbf16, #tpu.memory_space<vmem>>, %arg3: memref<1x256xf32, #tpu.memory_space<vmem>>, %arg4: memref<256x512xbf16, #tpu.memory_space<vmem>>, %arg5: memref<1x512xf32, #tpu.memory_space<vmem>>, %arg6: memref<512x128xbf16, #tpu.memory_space<vmem>>, %arg7: memref<16x128xf32, #tpu.memory_space<vmem>>) attributes {dimension_semantics = [#tpu.dimension_semantics<parallel>], iteration_bounds = array<i64: 1>, scalar_prefetch = 0 : i64, scratch_operands = 0 : i64, tpu.core_type = #tpu.core_type<tc>, window_params = [{transform_indices = @transform_0, window_bounds = array<i64: 16, 1024>}, {pipeline_mode = #tpu.pipeline_mode<synchronous>, transform_indices = @transform_1, window_bounds = array<i64: 1024, 256>}, {pipeline_mode = #tpu.pipeline_mode<synchronous>, transform_indices = @transform_2, window_bounds = array<i64: 1, 256>}, {pipeline_mode = #tpu.pipeline_mode<synchronous>, transform_indices = @transform_3, window_bounds = array<i64: 256, 512>}, {pipeline_mode = #tpu.pipeline_mode<synchronous>, transform_indices = @transform_4, window_bounds = array<i64: 1, 512>}, {pipeline_mode = #tpu.pipeline_mode<synchronous>, transform_indices = @transform_5, window_bounds = array<i64: 512, 128>}, {transform_indices = @transform_6, window_bounds = array<i64: 16, 128>}]} {
    %c0 = arith.constant 0 : index
    %c0_0 = arith.constant 0 : index
    %0 = vector.load %arg1[%c0, %c0_0] : memref<16x1024xf32, #tpu.memory_space<vmem>>, vector<16x1024xf32>
    %1 = arith.truncf %0 : vector<16x1024xf32> to vector<16x1024xbf16>
    %c0_1 = arith.constant 0 : index
    %c0_2 = arith.constant 0 : index
    %2 = vector.load %arg2[%c0_1, %c0_2] : memref<1024x256xbf16, #tpu.memory_space<vmem>>, vector<1024x256xbf16>
    %cst = arith.constant dense<0.000000e+00> : vector<16x256xf32>
    %3 = tpu.matmul %1, %2, %cst {dimension_numbers = #tpu.dot_dimension_numbers<[1], [0], [0], [1], [0, 0, 1, 1], [], []>} : vector<16x1024xbf16>, vector<1024x256xbf16>, vector<16x256xf32> -> vector<16x256xf32>
    %c0_3 = arith.constant 0 : index
    %c0_4 = arith.constant 0 : index
    %4 = vector.load %arg3[%c0_3, %c0_4] : memref<1x256xf32, #tpu.memory_space<vmem>>, vector<1x256xf32>
    %5 = vector.broadcast %4 : vector<1x256xf32> to vector<16x256xf32>
    %6 = arith.addf %3, %5 : vector<16x256xf32>
    %7 = arith.truncf %6 : vector<16x256xf32> to vector<16x256xbf16>
    %c0_5 = arith.constant 0 : index
    %c0_6 = arith.constant 0 : index
    %8 = vector.load %arg4[%c0_5, %c0_6] : memref<256x512xbf16, #tpu.memory_space<vmem>>, vector<256x512xbf16>
    %cst_7 = arith.constant dense<0.000000e+00> : vector<16x512xf32>
    %9 = tpu.matmul %7, %8, %cst_7 {dimension_numbers = #tpu.dot_dimension_numbers<[1], [0], [0], [1], [0, 0, 1, 1], [], []>} : vector<16x256xbf16>, vector<256x512xbf16>, vector<16x512xf32> -> vector<16x512xf32>
    %c0_8 = arith.constant 0 : index
    %c0_9 = arith.constant 0 : index
    %10 = vector.load %arg5[%c0_8, %c0_9] : memref<1x512xf32, #tpu.memory_space<vmem>>, vector<1x512xf32>
    %11 = vector.broadcast %10 : vector<1x512xf32> to vector<16x512xf32>
    %12 = arith.addf %9, %11 : vector<16x512xf32>
    %13 = arith.truncf %12 : vector<16x512xf32> to vector<16x512xbf16>
    %c0_10 = arith.constant 0 : index
    %c0_11 = arith.constant 0 : index
    %14 = vector.load %arg6[%c0_10, %c0_11] : memref<512x128xbf16, #tpu.memory_space<vmem>>, vector<512x128xbf16>
    %cst_12 = arith.constant dense<0.000000e+00> : vector<16x128xf32>
    %15 = tpu.matmul %13, %14, %cst_12 {dimension_numbers = #tpu.dot_dimension_numbers<[1], [0], [0], [1], [0, 0, 1, 1], [], []>} : vector<16x512xbf16>, vector<512x128xbf16>, vector<16x128xf32> -> vector<16x128xf32>
    %c0_13 = arith.constant 0 : index
    %c0_14 = arith.constant 0 : index
    %16 = vector.load %arg7[%c0_13, %c0_14] : memref<16x128xf32, #tpu.memory_space<vmem>>, vector<16x128xf32>
    tpu.vector_store %arg7[%c0_13, %c0_14], %15 {strides = array<i32>} : memref<16x128xf32, #tpu.memory_space<vmem>>, vector<16x128xf32>,
    return
  }
  func.func @transform_0(%arg0: i32) -> (i32, i32) {
    %c0_i32 = arith.constant 0 : i32
    %c0_i32_0 = arith.constant 0 : i32
    return %arg0, %c0_i32 : i32, i32
  }
  func.func @transform_1(%arg0: i32) -> (i32, i32) {
    %c0_i32 = arith.constant 0 : i32
    %c0_i32_0 = arith.constant 0 : i32
    %c0_i32_1 = arith.constant 0 : i32
    return %c0_i32, %c0_i32_0 : i32, i32
  }
  func.func @transform_2(%arg0: i32) -> (i32, i32) {
    %c0_i32 = arith.constant 0 : i32
    %c0_i32_0 = arith.constant 0 : i32
    %c0_i32_1 = arith.constant 0 : i32
    return %c0_i32, %c0_i32_0 : i32, i32
  }
  func.func @transform_3(%arg0: i32) -> (i32, i32) {
    %c0_i32 = arith.constant 0 : i32
    %c0_i32_0 = arith.constant 0 : i32
    %c0_i32_1 = arith.constant 0 : i32
    return %c0_i32, %c0_i32_0 : i32, i32
  }
  func.func @transform_4(%arg0: i32) -> (i32, i32) {
    %c0_i32 = arith.constant 0 : i32
    %c0_i32_0 = arith.constant 0 : i32
    %c0_i32_1 = arith.constant 0 : i32
    return %c0_i32, %c0_i32_0 : i32, i32
  }
  func.func @transform_5(%arg0: i32) -> (i32, i32) {
    %c0_i32 = arith.constant 0 : i32
    %c0_i32_0 = arith.constant 0 : i32
    %c0_i32_1 = arith.constant 0 : i32
    return %c0_i32, %c0_i32_0 : i32, i32
  }
  func.func @transform_6(%arg0: i32) -> (i32, i32) {
    %c0_i32 = arith.constant 0 : i32
    %c0_i32_0 = arith.constant 0 : i32
    return %arg0, %c0_i32 : i32, i32
  }
}

</mosaic_0001>

<llo_original>
// kernel: tpu_custom_call.1
$region0: #{tpu_custom_call.1}
  #allocation0 [shape = 'u32[]', space=smem, size = 0x4, offset = 0x4, fixed_abs, tag = 'smem constant byte address 0x4 - core index']
  #allocation1 [shape = 'u32[144,128]{1,0:T(1,128)}', space=vmem, size = 0x12000, scoped, tag = 'internal scratch']
  %s0 = inlined_call_operand.hbm [shape: f32[16,1024], index: 0, kind: input, shape index: {}]
  %s1 = inlined_call_operand.hbm [shape: bf16[1024,256], index: 1, kind: input, shape index: {}]
  %s2 = inlined_call_operand.vmem [shape: f32[1,256], index: 2, kind: input, shape index: {}]
  %s3 = inlined_call_operand.hbm [shape: bf16[256,512], index: 3, kind: input, shape index: {}]
  %s4 = inlined_call_operand.vmem [shape: f32[1,512], index: 4, kind: input, shape index: {}]
  %s5 = inlined_call_operand.hbm [shape: bf16[512,128], index: 5, kind: input, shape index: {}]
  %s6 = inlined_call_operand.hbm [shape: f32[16,128], index: 6, kind: output, shape index: {}]
  %s7 = sld [smem:[#allocation0]]
  $region50: #{tpu_custom_call.1} parent=0
    _
  %s9 = ssub.s32 1, %s7
  %s10 = scalar_select 0, %s9, %s7
  $region1: #{tpu_custom_call.1} parent=0
    #allocation2 [shape = 'u8[65536]{0}', space=vmem, size = 0x10000, scoped, tag = 'input window, operand 0, single buffered']
    #allocation3 [shape = 's32[1]{0}', space=sflag, size = 0x4, scoped, tag = 'scoped memory for tpu_custom_call.1']
    #allocation4 [shape = 's32[1]{0}', space=sflag, size = 0x4, scoped, tag = 'scoped memory for tpu_custom_call.1']
    #allocation5 [shape = 'u8[524288]{0}', space=vmem, size = 0x80000, scoped, tag = 'input window, operand 1, single buffered']
    #allocation6 [shape = 's32[1]{0}', space=sflag, size = 0x4, scoped, tag = 'scoped memory for tpu_custom_call.1']
    #allocation7 [shape = 'u8[262144]{0}', space=vmem, size = 0x40000, scoped, tag = 'input window, operand 3, single buffered']
    #allocation8 [shape = 'u8[131072]{0}', space=vmem, size = 0x20000, scoped, tag = 'input window, operand 5, single buffered']
    #allocation9 [shape = 's32[1]{0}', space=sflag, size = 0x4, scoped, tag = 'scoped memory for tpu_custom_call.1']
    #allocation10 [shape = 'u8[8192]{0}', space=vmem, size = 0x2000, scoped, tag = 'output window, operand 0, single buffered']
    %11 = vsyncpa [#allocation3], 0
    %12 = vsyncpa [#allocation6], 0
    %13 = vsyncpa [#allocation9], 0
    %14 = vsyncpa [#allocation4], 0
    // Predicated region
    $region2: #{tpu_custom_call.1} parent=1 // pred_check
      _
    $region3: #{tpu_custom_call.1} parent=1 // pred_check_branch
      %16 = sbr.rel (0) target = $region5
    $region4: #{tpu_custom_call.1} parent=1 // pred_region
      %s18 = ssub.s32 2048, 2048
      %19 = vsyncadd [#allocation3], %s18
      %s20 = sshll.u32 [#allocation2], 4
      %s21 = int_to_ptr.vmem [resolvable:$true] %s20
      %26 = dma.hbm_to_vmem [thread:$0]  %s0, 2048, %s21, [#allocation3], 1024, 1024, 64
    $region5: #{tpu_custom_call.1} parent=1 // pred_fallthru
      _
    // Predicated region
    $region6: #{tpu_custom_call.1} parent=1 // pred_check
      _
    $region7: #{tpu_custom_call.1} parent=1 // pred_check_branch
      %28 = sbr.rel (0) target = $region9
    $region8: #{tpu_custom_call.1} parent=1 // pred_region
      %s30 = ssub.s32 16384, 16384
      %31 = vsyncadd [#allocation6], %s30
      %s32 = sshll.u32 [#allocation5], 4
      %s33 = int_to_ptr.vmem [resolvable:$true] %s32
      %38 = dma.hbm_to_vmem [thread:$0]  %s1, 16384, %s33, [#allocation6], 128, 128, 8
    $region9: #{tpu_custom_call.1} parent=1 // pred_fallthru
      _
    // Predicated region
    $region10: #{tpu_custom_call.1} parent=1 // pred_check
      _
    $region11: #{tpu_custom_call.1} parent=1 // pred_check_branch
      %40 = sbr.rel (0) target = $region13
    $region12: #{tpu_custom_call.1} parent=1 // pred_region
      _
    $region13: #{tpu_custom_call.1} parent=1 // pred_fallthru
      _
    // Predicated region
    $region14: #{tpu_custom_call.1} parent=1 // pred_check
      _
    $region15: #{tpu_custom_call.1} parent=1 // pred_check_branch
      %42 = sbr.rel (0) target = $region17
    $region16: #{tpu_custom_call.1} parent=1 // pred_region
      %s44 = ssub.s32 8192, 8192
      %45 = vsyncadd [#allocation6], %s44
      %s46 = sshll.u32 [#allocation7], 4
      %s47 = int_to_ptr.vmem [resolvable:$true] %s46
      %52 = dma.hbm_to_vmem [thread:$0]  %s3, 8192, %s47, [#allocation6], 256, 256, 16
    $region17: #{tpu_custom_call.1} parent=1 // pred_fallthru
      _
    // Predicated region
    $region18: #{tpu_custom_call.1} parent=1 // pred_check
      _
    $region19: #{tpu_custom_call.1} parent=1 // pred_check_branch
      %54 = sbr.rel (0) target = $region21
    $region20: #{tpu_custom_call.1} parent=1 // pred_region
      _
    $region21: #{tpu_custom_call.1} parent=1 // pred_fallthru
      _
    // Predicated region
    $region22: #{tpu_custom_call.1} parent=1 // pred_check
      _
    $region23: #{tpu_custom_call.1} parent=1 // pred_check_branch
      %56 = sbr.rel (0) target = $region25
    $region24: #{tpu_custom_call.1} parent=1 // pred_region
      %s58 = ssub.s32 4096, 4096
      %59 = vsyncadd [#allocation9], %s58
      %s60 = sshll.u32 [#allocation8], 4
      %s61 = int_to_ptr.vmem [resolvable:$true] %s60
      %66 = dma.hbm_to_vmem [thread:$0]  %s5, 4096, %s61, [#allocation9], 64, 64, 4
    $region25: #{tpu_custom_call.1} parent=1 // pred_fallthru
      _
    // Predicated region
    $region26: #{tpu_custom_call.1} parent=1 // pred_check
      _
    $region27: #{tpu_custom_call.1} parent=1 // pred_check_branch
      %68 = sbr.rel (0) target = $region29
    $region28: #{tpu_custom_call.1} parent=1 // pred_region
      %69 = dma.done [#allocation3], 2048
    $region29: #{tpu_custom_call.1} parent=1 // pred_fallthru
      _
    // Predicated region
    $region30: #{tpu_custom_call.1} parent=1 // pred_check
      _
    $region31: #{tpu_custom_call.1} parent=1 // pred_check_branch
      %71 = sbr.rel (0) target = $region33
    $region32: #{tpu_custom_call.1} parent=1 // pred_region
      %72 = dma.done [#allocation6], 16384
    $region33: #{tpu_custom_call.1} parent=1 // pred_fallthru
      _
    // Predicated region
    $region34: #{tpu_custom_call.1} parent=1 // pred_check
      _
    $region35: #{tpu_custom_call.1} parent=1 // pred_check_branch
      %74 = sbr.rel (0) target = $region37
    $region36: #{tpu_custom_call.1} parent=1 // pred_region
      %75 = dma.done [#allocation6], 8192
    $region37: #{tpu_custom_call.1} parent=1 // pred_fallthru
      _
    // Predicated region
    $region38: #{tpu_custom_call.1} parent=1 // pred_check
      _
    $region39: #{tpu_custom_call.1} parent=1 // pred_check_branch
      %77 = sbr.rel (0) target = $region41
    $region40: #{tpu_custom_call.1} parent=1 // pred_region
      %78 = dma.done [#allocation9], 4096
    $region41: #{tpu_custom_call.1} parent=1 // pred_fallthru
      _
    %v80 = vld [vmem:[#allocation2] sm:$0xff]
    %v81 = vld [vmem:[#allocation2 + $0x8] sm:$0xff]
    %v82 = vld [vmem:[#allocation2 + $0x10] sm:$0xff]
    %v83 = vld [vmem:[#allocation2 + $0x18] sm:$0xff]
    %v84 = vld [vmem:[#allocation2 + $0x20] sm:$0xff]
    %v85 = vld [vmem:[#allocation2 + $0x28] sm:$0xff]
    %v86 = vld [vmem:[#allocation2 + $0x30] sm:$0xff]
    %v87 = vld [vmem:[#allocation2 + $0x38] sm:$0xff]
    %v88 = vld [vmem:[#allocation2 + $0x40] sm:$0xff]
    %v89 = vld [vmem:[#allocation2 + $0x48] sm:$0xff]
    %v90 = vld [vmem:[#allocation2 + $0x50] sm:$0xff]
    %v91 = vld [vmem:[#allocation2 + $0x58] sm:$0xff]
    %v92 = vld [vmem:[#allocation2 + $0x60] sm:$0xff]
    %v93 = vld [vmem:[#allocation2 + $0x68] sm:$0xff]
    %v94 = vld [vmem:[#allocation2 + $0x70] sm:$0xff]
    %v95 = vld [vmem:[#allocation2 + $0x78] sm:$0xff]
    %v96 = vpack.c.bf16 %v88, %v80
    %v97 = vpack.c.bf16 %v89, %v81
    %v98 = vpack.c.bf16 %v90, %v82
    %v99 = vpack.c.bf16 %v91, %v83
    %v100 = vpack.c.bf16 %v92, %v84
    %v101 = vpack.c.bf16 %v93, %v85
    %v102 = vpack.c.bf16 %v94, %v86
    %v103 = vpack.c.bf16 %v95, %v87
    %v104 = vld [vmem:[#allocation5] sm:$0xff]
    %v105 = vld [vmem:[#allocation5 + $0x8] sm:$0xff]
    %v106 = vld [vmem:[#allocation5 + $0x10] sm:$0xff]
    %v107 = vld [vmem:[#allocation5 + $0x18] sm:$0xff]
    %v108 = vld [vmem:[#allocation5 + $0x20] sm:$0xff]
    %v109 = vld [vmem:[#allocation5 + $0x28] sm:$0xff]
    %v110 = vld [vmem:[#allocation5 + $0x30] sm:$0xff]
    %v111 = vld [vmem:[#allocation5 + $0x38] sm:$0xff]
    %v112 = vld [vmem:[#allocation5 + $0x40] sm:$0xff]
    %v113 = vld [vmem:[#allocation5 + $0x48] sm:$0xff]
    %v114 = vld [vmem:[#allocation5 + $0x50] sm:$0xff]
    %v115 = vld [vmem:[#allocation5 + $0x58] sm:$0xff]
    %v116 = vld [vmem:[#allocation5 + $0x60] sm:$0xff]
    %v117 = vld [vmem:[#allocation5 + $0x68] sm:$0xff]
    %v118 = vld [vmem:[#allocation5 + $0x70] sm:$0xff]
    %v119 = vld [vmem:[#allocation5 + $0x78] sm:$0xff]
    %v120 = vld [vmem:[#allocation5 + $0x80] sm:$0xff]
    %v121 = vld [vmem:[#allocation5 + $0x88] sm:$0xff]
    %v122 = vld [vmem:[#allocation5 + $0x90] sm:$0xff]
    %v123 = vld [vmem:[#allocation5 + $0x98] sm:$0xff]
    %v124 = vld [vmem:[#allocation5 + $0xa0] sm:$0xff]
    %v125 = vld [vmem:[#allocation5 + $0xa8] sm:$0xff]
    %v126 = vld [vmem:[#allocation5 + $0xb0] sm:$0xff]
    %v127 = vld [vmem:[#allocation5 + $0xb8] sm:$0xff]
    %v128 = vld [vmem:[#allocation5 + $0xc0] sm:$0xff]
    %v129 = vld [vmem:[#allocation5 + $0xc8] sm:$0xff]
    %v130 = vld [vmem:[#allocation5 + $0xd0] sm:$0xff]
    %v131 = vld [vmem:[#allocation5 + $0xd8] sm:$0xff]
    %v132 = vld [vmem:[#allocation5 + $0xe0] sm:$0xff]
    %v133 = vld [vmem:[#allocation5 + $0xe8] sm:$0xff]
    %v134 = vld [vmem:[#allocation5 + $0xf0] sm:$0xff]
    %v135 = vld [vmem:[#allocation5 + $0xf8] sm:$0xff]
    %v136 = vld [vmem:[#allocation5 + $0x100] sm:$0xff]
    %v137 = vld [vmem:[#allocation5 + $0x108] sm:$0xff]
    %v138 = vld [vmem:[#allocation5 + $0x110] sm:$0xff]
    %v139 = vld [vmem:[#allocation5 + $0x118] sm:$0xff]
    %v140 = vld [vmem:[#allocation5 + $0x120] sm:$0xff]
    %v141 = vld [vmem:[#allocation5 + $0x128] sm:$0xff]
    %v142 = vld [vmem:[#allocation5 + $0x130] sm:$0xff]
    %v143 = vld [vmem:[#allocation5 + $0x138] sm:$0xff]
    %v144 = vld [vmem:[#allocation5 + $0x140] sm:$0xff]
    %v145 = vld [vmem:[#allocation5 + $0x148] sm:$0xff]
    %v146 = vld [vmem:[#allocation5 + $0x150] sm:$0xff]
    %v147 = vld [vmem:[#allocation5 + $0x158] sm:$0xff]
    %v148 = vld [vmem:[#allocation5 + $0x160] sm:$0xff]
    %v149 = vld [vmem:[#allocation5 + $0x168] sm:$0xff]
    %v150 = vld [vmem:[#allocation5 + $0x170] sm:$0xff]
    %v151 = vld [vmem:[#allocation5 + $0x178] sm:$0xff]
    %v152 = vld [vmem:[#allocation5 + $0x180] sm:$0xff]
    %v153 = vld [vmem:[#allocation5 + $0x188] sm:$0xff]
    %v154 = vld [vmem:[#allocation5 + $0x190] sm:$0xff]
    %v155 = vld [vmem:[#allocation5 + $0x198] sm:$0xff]
    %v156 = vld [vmem:[#allocation5 + $0x1a0] sm:$0xff]
    %v157 = vld [vmem:[#allocation5 + $0x1a8] sm:$0xff]
    %v158 = vld [vmem:[#allocation5 + $0x1b0] sm:$0xff]
    %v159 = vld [vmem:[#allocation5 + $0x1b8] sm:$0xff]
    %v160 = vld [vmem:[#allocation5 + $0x1c0] sm:$0xff]
    %v161 = vld [vmem:[#allocation5 + $0x1c8] sm:$0xff]
    %v162 = vld [vmem:[#allocation5 + $0x1d0] sm:$0xff]
    %v163 = vld [vmem:[#allocation5 + $0x1d8] sm:$0xff]
    %v164 = vld [vmem:[#allocation5 + $0x1e0] sm:$0xff]
    %v165 = vld [vmem:[#allocation5 + $0x1e8] sm:$0xff]
    %v166 = vld [vmem:[#allocation5 + $0x1f0] sm:$0xff]
    %v167 = vld [vmem:[#allocation5 + $0x1f8] sm:$0xff]
    %v168 = vld [vmem:[#allocation5 + $0x200] sm:$0xff]
    %v169 = vld [vmem:[#allocation5 + $0x208] sm:$0xff]
    %v170 = vld [vmem:[#allocation5 + $0x210] sm:$0xff]
    %v171 = vld [vmem:[#allocation5 + $0x218] sm:$0xff]
    %v172 = vld [vmem:[#allocation5 + $0x220] sm:$0xff]
    %v173 = vld [vmem:[#allocation5 + $0x228] sm:$0xff]
    %v174 = vld [vmem:[#allocation5 + $0x230] sm:$0xff]
    %v175 = vld [vmem:[#allocation5 + $0x238] sm:$0xff]
    %v176 = vld [vmem:[#allocation5 + $0x240] sm:$0xff]
    %v177 = vld [vmem:[#allocation5 + $0x248] sm:$0xff]
    %v178 = vld [vmem:[#allocation5 + $0x250] sm:$0xff]
    %v179 = vld [vmem:[#allocation5 + $0x258] sm:$0xff]
    %v180 = vld [vmem:[#allocation5 + $0x260] sm:$0xff]
    %v181 = vld [vmem:[#allocation5 + $0x268] sm:$0xff]
    %v182 = vld [vmem:[#allocation5 + $0x270] sm:$0xff]
    %v183 = vld [vmem:[#allocation5 + $0x278] sm:$0xff]
    %v184 = vld [vmem:[#allocation5 + $0x280] sm:$0xff]
    %v185 = vld [vmem:[#allocation5 + $0x288] sm:$0xff]
    %v186 = vld [vmem:[#allocation5 + $0x290] sm:$0xff]
    %v187 = vld [vmem:[#allocation5 + $0x298] sm:$0xff]
    %v188 = vld [vmem:[#allocation5 + $0x2a0] sm:$0xff]
    %v189 = vld [vmem:[#allocation5 + $0x2a8] sm:$0xff]
    %v190 = vld [vmem:[#allocation5 + $0x2b0] sm:$0xff]
    %v191 = vld [vmem:[#allocation5 + $0x2b8] sm:$0xff]
    %v192 = vld [vmem:[#allocation5 + $0x2c0] sm:$0xff]
    %v193 = vld [vmem:[#allocation5 + $0x2c8] sm:$0xff]
    %v194 = vld [vmem:[#allocation5 + $0x2d0] sm:$0xff]
    %v195 = vld [vmem:[#allocation5 + $0x2d8] sm:$0xff]
    %v196 = vld [vmem:[#allocation5 + $0x2e0] sm:$0xff]
    %v197 = vld [vmem:[#allocation5 + $0x2e8] sm:$0xff]
    %v198 = vld [vmem:[#allocation5 + $0x2f0] sm:$0xff]
    %v199 = vld [vmem:[#allocation5 + $0x2f8] sm:$0xff]
    %v200 = vld [vmem:[#allocation5 + $0x300] sm:$0xff]
    %v201 = vld [vmem:[#allocation5 + $0x308] sm:$0xff]
    %v202 = vld [vmem:[#allocation5 + $0x310] sm:$0xff]
    %v203 = vld [vmem:[#allocation5 + $0x318] sm:$0xff]
    %v204 = vld [vmem:[#allocation5 + $0x320] sm:$0xff]
    %v205 = vld [vmem:[#allocation5 + $0x328] sm:$0xff]
    %v206 = vld [vmem:[#allocation5 + $0x330] sm:$0xff]
    %v207 = vld [vmem:[#allocation5 + $0x338] sm:$0xff]
    %v208 = vld [vmem:[#allocation5 + $0x340] sm:$0xff]
    %v209 = vld [vmem:[#allocation5 + $0x348] sm:$0xff]
    %v210 = vld [vmem:[#allocation5 + $0x350] sm:$0xff]
    %v211 = vld [vmem:[#allocation5 + $0x358] sm:$0xff]
    %v212 = vld [vmem:[#allocation5 + $0x360] sm:$0xff]
    %v213 = vld [vmem:[#allocation5 + $0x368] sm:$0xff]
    %v214 = vld [vmem:[#allocation5 + $0x370] sm:$0xff]
    %v215 = vld [vmem:[#allocation5 + $0x378] sm:$0xff]
    %v216 = vld [vmem:[#allocation5 + $0x380] sm:$0xff]
    %v217 = vld [vmem:[#allocation5 + $0x388] sm:$0xff]
    %v218 = vld [vmem:[#allocation5 + $0x390] sm:$0xff]
    %v219 = vld [vmem:[#allocation5 + $0x398] sm:$0xff]
    %v220 = vld [vmem:[#allocation5 + $0x3a0] sm:$0xff]
    %v221 = vld [vmem:[#allocation5 + $0x3a8] sm:$0xff]
    %v222 = vld [vmem:[#allocation5 + $0x3b0] sm:$0xff]
    %v223 = vld [vmem:[#allocation5 + $0x3b8] sm:$0xff]
    %v224 = vld [vmem:[#allocation5 + $0x3c0] sm:$0xff]
    %v225 = vld [vmem:[#allocation5 + $0x3c8] sm:$0xff]
    %v226 = vld [vmem:[#allocation5 + $0x3d0] sm:$0xff]
    %v227 = vld [vmem:[#allocation5 + $0x3d8] sm:$0xff]
    %v228 = vld [vmem:[#allocation5 + $0x3e0] sm:$0xff]
    %v229 = vld [vmem:[#allocation5 + $0x3e8] sm:$0xff]
    %v230 = vld [vmem:[#allocation5 + $0x3f0] sm:$0xff]
    %v231 = vld [vmem:[#allocation5 + $0x3f8] sm:$0xff]
    %v232 = vld [vmem:[%s2] sm:$0x3]
    %v234 = vlaneseq
    %v235 = vshrl.u32 %v234, 7
    %v236 = vsub.s32 0, %v235
    %v237 = vrot.slane %v232, %v236
    %v238 = vlaneseq
    %v239 = vshrl.u32 %v238, 7
    %v240 = vsub.s32 1, %v239
    %v241 = vrot.slane %v232, %v240
    %v372 = vunpack.c.l.b16 %v104
    %v373 = vunpack.c.h.b16 %v104
    %v374 = vunpack.c.l.b16 %v105
    %v375 = vunpack.c.h.b16 %v105
    %v376 = vunpack.c.l.b16 %v106
    %v377 = vunpack.c.h.b16 %v106
    %v378 = vunpack.c.l.b16 %v107
    %v379 = vunpack.c.h.b16 %v107
    %v380 = vunpack.c.l.b16 %v108
    %v381 = vunpack.c.h.b16 %v108
    %v382 = vunpack.c.l.b16 %v109
    %v383 = vunpack.c.h.b16 %v109
    %v384 = vunpack.c.l.b16 %v110
    %v385 = vunpack.c.h.b16 %v110
    %v386 = vunpack.c.l.b16 %v111
    %v387 = vunpack.c.h.b16 %v111
    %v388 = vunpack.c.l.b16 %v112
    %v389 = vunpack.c.h.b16 %v112
    %v390 = vunpack.c.l.b16 %v113
    %v391 = vunpack.c.h.b16 %v113
    %v392 = vunpack.c.l.b16 %v114
    %v393 = vunpack.c.h.b16 %v114
    %v394 = vunpack.c.l.b16 %v115
    %v395 = vunpack.c.h.b16 %v115
    %v396 = vunpack.c.l.b16 %v116
    %v397 = vunpack.c.h.b16 %v116
    %v398 = vunpack.c.l.b16 %v117
    %v399 = vunpack.c.h.b16 %v117
    %v400 = vunpack.c.l.b16 %v118
    %v401 = vunpack.c.h.b16 %v118
    %v402 = vunpack.c.l.b16 %v119
    %v403 = vunpack.c.h.b16 %v119
    %v404 = vunpack.c.l.b16 %v120
    %v405 = vunpack.c.h.b16 %v120
    %v406 = vunpack.c.l.b16 %v121
    %v407 = vunpack.c.h.b16 %v121
    %v408 = vunpack.c.l.b16 %v122
    %v409 = vunpack.c.h.b16 %v122
    %v410 = vunpack.c.l.b16 %v123
    %v411 = vunpack.c.h.b16 %v123
    %v412 = vunpack.c.l.b16 %v124
    %v413 = vunpack.c.h.b16 %v124
    %v414 = vunpack.c.l.b16 %v125
    %v415 = vunpack.c.h.b16 %v125
    %v416 = vunpack.c.l.b16 %v126
    %v417 = vunpack.c.h.b16 %v126
    %v418 = vunpack.c.l.b16 %v127
    %v419 = vunpack.c.h.b16 %v127
    %v420 = vunpack.c.l.b16 %v128
    %v421 = vunpack.c.h.b16 %v128
    %v422 = vunpack.c.l.b16 %v129
    %v423 = vunpack.c.h.b16 %v129
    %v424 = vunpack.c.l.b16 %v130
    %v425 = vunpack.c.h.b16 %v130
    %v426 = vunpack.c.l.b16 %v131
    %v427 = vunpack.c.h.b16 %v131
    %v428 = vunpack.c.l.b16 %v132
    %v429 = vunpack.c.h.b16 %v132
    %v430 = vunpack.c.l.b16 %v133
    %v431 = vunpack.c.h.b16 %v133
    %v432 = vunpack.c.l.b16 %v134
    %v433 = vunpack.c.h.b16 %v134
    %v434 = vunpack.c.l.b16 %v135
    %v435 = vunpack.c.h.b16 %v135
    %v436 = vunpack.c.l.b16 %v136
    %v437 = vunpack.c.h.b16 %v136
    %v438 = vunpack.c.l.b16 %v137
    %v439 = vunpack.c.h.b16 %v137
    %v440 = vunpack.c.l.b16 %v138
    %v441 = vunpack.c.h.b16 %v138
    %v442 = vunpack.c.l.b16 %v139
    %v443 = vunpack.c.h.b16 %v139
    %v444 = vunpack.c.l.b16 %v140
    %v445 = vunpack.c.h.b16 %v140
    %v446 = vunpack.c.l.b16 %v141
    %v447 = vunpack.c.h.b16 %v141
    %v448 = vunpack.c.l.b16 %v142
    %v449 = vunpack.c.h.b16 %v142
    %v450 = vunpack.c.l.b16 %v143
    %v451 = vunpack.c.h.b16 %v143
    %v452 = vunpack.c.l.b16 %v144
    %v453 = vunpack.c.h.b16 %v144
    %v454 = vunpack.c.l.b16 %v145
    %v455 = vunpack.c.h.b16 %v145
    %v456 = vunpack.c.l.b16 %v146
    %v457 = vunpack.c.h.b16 %v146
    %v458 = vunpack.c.l.b16 %v147
    %v459 = vunpack.c.h.b16 %v147
    %v460 = vunpack.c.l.b16 %v148
    %v461 = vunpack.c.h.b16 %v148
    %v462 = vunpack.c.l.b16 %v149
    %v463 = vunpack.c.h.b16 %v149
    %v464 = vunpack.c.l.b16 %v150
    %v465 = vunpack.c.h.b16 %v150
    %v466 = vunpack.c.l.b16 %v151
    %v467 = vunpack.c.h.b16 %v151
    %v468 = vunpack.c.l.b16 %v152
    %v469 = vunpack.c.h.b16 %v152
    %v470 = vunpack.c.l.b16 %v153
    %v471 = vunpack.c.h.b16 %v153
    %v472 = vunpack.c.l.b16 %v154
    %v473 = vunpack.c.h.b16 %v154
    %v474 = vunpack.c.l.b16 %v155
    %v475 = vunpack.c.h.b16 %v155
    %v476 = vunpack.c.l.b16 %v156
    %v477 = vunpack.c.h.b16 %v156
    %v478 = vunpack.c.l.b16 %v157
    %v479 = vunpack.c.h.b16 %v157
    %v480 = vunpack.c.l.b16 %v158
    %v481 = vunpack.c.h.b16 %v158
    %v482 = vunpack.c.l.b16 %v159
    %v483 = vunpack.c.h.b16 %v159
    %v484 = vunpack.c.l.b16 %v160
    %v485 = vunpack.c.h.b16 %v160
    %v486 = vunpack.c.l.b16 %v161
    %v487 = vunpack.c.h.b16 %v161
    %v488 = vunpack.c.l.b16 %v162
    %v489 = vunpack.c.h.b16 %v162
    %v490 = vunpack.c.l.b16 %v163
    %v491 = vunpack.c.h.b16 %v163
    %v492 = vunpack.c.l.b16 %v164
    %v493 = vunpack.c.h.b16 %v164
    %v494 = vunpack.c.l.b16 %v165
    %v495 = vunpack.c.h.b16 %v165
    %v496 = vunpack.c.l.b16 %v166
    %v497 = vunpack.c.h.b16 %v166
    %v498 = vunpack.c.l.b16 %v167
    %v499 = vunpack.c.h.b16 %v167
    %v500 = vunpack.c.l.b16 %v168
    %v501 = vunpack.c.h.b16 %v168
    %v502 = vunpack.c.l.b16 %v169
    %v503 = vunpack.c.h.b16 %v169
    %v504 = vunpack.c.l.b16 %v170
    %v505 = vunpack.c.h.b16 %v170
    %v506 = vunpack.c.l.b16 %v171
    %v507 = vunpack.c.h.b16 %v171
    %v508 = vunpack.c.l.b16 %v172
    %v509 = vunpack.c.h.b16 %v172
    %v510 = vunpack.c.l.b16 %v173
    %v511 = vunpack.c.h.b16 %v173
    %v512 = vunpack.c.l.b16 %v174
    %v513 = vunpack.c.h.b16 %v174
    %v514 = vunpack.c.l.b16 %v175
    %v515 = vunpack.c.h.b16 %v175
    %v516 = vunpack.c.l.b16 %v176
    %v517 = vunpack.c.h.b16 %v176
    %v518 = vunpack.c.l.b16 %v177
    %v519 = vunpack.c.h.b16 %v177
    %v520 = vunpack.c.l.b16 %v178
    %v521 = vunpack.c.h.b16 %v178
    %v522 = vunpack.c.l.b16 %v179
    %v523 = vunpack.c.h.b16 %v179
    %v524 = vunpack.c.l.b16 %v180
    %v525 = vunpack.c.h.b16 %v180
    %v526 = vunpack.c.l.b16 %v181
    %v527 = vunpack.c.h.b16 %v181
    %v528 = vunpack.c.l.b16 %v182
    %v529 = vunpack.c.h.b16 %v182
    %v530 = vunpack.c.l.b16 %v183
    %v531 = vunpack.c.h.b16 %v183
    %v532 = vunpack.c.l.b16 %v184
    %v533 = vunpack.c.h.b16 %v184
    %v534 = vunpack.c.l.b16 %v185
    %v535 = vunpack.c.h.b16 %v185
    %v536 = vunpack.c.l.b16 %v186
    %v537 = vunpack.c.h.b16 %v186
    %v538 = vunpack.c.l.b16 %v187
    %v539 = vunpack.c.h.b16 %v187
    %v540 = vunpack.c.l.b16 %v188
    %v541 = vunpack.c.h.b16 %v188
    %v542 = vunpack.c.l.b16 %v189
    %v543 = vunpack.c.h.b16 %v189
    %v544 = vunpack.c.l.b16 %v190
    %v545 = vunpack.c.h.b16 %v190
    %v546 = vunpack.c.l.b16 %v191
    %v547 = vunpack.c.h.b16 %v191
    %v548 = vunpack.c.l.b16 %v192
    %v549 = vunpack.c.h.b16 %v192
    %v550 = vunpack.c.l.b16 %v193
    %v551 = vunpack.c.h.b16 %v193
    %v552 = vunpack.c.l.b16 %v194
    %v553 = vunpack.c.h.b16 %v194
    %v554 = vunpack.c.l.b16 %v195
    %v555 = vunpack.c.h.b16 %v195
    %v556 = vunpack.c.l.b16 %v196
    %v557 = vunpack.c.h.b16 %v196
    %v558 = vunpack.c.l.b16 %v197
    %v559 = vunpack.c.h.b16 %v197
    %v560 = vunpack.c.l.b16 %v198
    %v561 = vunpack.c.h.b16 %v198
    %v562 = vunpack.c.l.b16 %v199
    %v563 = vunpack.c.h.b16 %v199
    %v564 = vunpack.c.l.b16 %v200
    %v565 = vunpack.c.h.b16 %v200
    %v566 = vunpack.c.l.b16 %v201
    %v567 = vunpack.c.h.b16 %v201
    %v568 = vunpack.c.l.b16 %v202
    %v569 = vunpack.c.h.b16 %v202
    %v570 = vunpack.c.l.b16 %v203
    %v571 = vunpack.c.h.b16 %v203
    %v572 = vunpack.c.l.b16 %v204
    %v573 = vunpack.c.h.b16 %v204
    %v574 = vunpack.c.l.b16 %v205
    %v575 = vunpack.c.h.b16 %v205
    %v576 = vunpack.c.l.b16 %v206
    %v577 = vunpack.c.h.b16 %v206
    %v578 = vunpack.c.l.b16 %v207
    %v579 = vunpack.c.h.b16 %v207
    %v580 = vunpack.c.l.b16 %v208
    %v581 = vunpack.c.h.b16 %v208
    %v582 = vunpack.c.l.b16 %v209
    %v583 = vunpack.c.h.b16 %v209
    %v584 = vunpack.c.l.b16 %v210
    %v585 = vunpack.c.h.b16 %v210
    %v586 = vunpack.c.l.b16 %v211
    %v587 = vunpack.c.h.b16 %v211
    %v588 = vunpack.c.l.b16 %v212
    %v589 = vunpack.c.h.b16 %v212
    %v590 = vunpack.c.l.b16 %v213
    %v591 = vunpack.c.h.b16 %v213
    %v592 = vunpack.c.l.b16 %v214
    %v593 = vunpack.c.h.b16 %v214
    %v594 = vunpack.c.l.b16 %v215
    %v595 = vunpack.c.h.b16 %v215
    %v596 = vunpack.c.l.b16 %v216
    %v597 = vunpack.c.h.b16 %v216
    %v598 = vunpack.c.l.b16 %v217
    %v599 = vunpack.c.h.b16 %v217
    %v600 = vunpack.c.l.b16 %v218
    %v601 = vunpack.c.h.b16 %v218
    %v602 = vunpack.c.l.b16 %v219
    %v603 = vunpack.c.h.b16 %v219
    %v604 = vunpack.c.l.b16 %v220
    %v605 = vunpack.c.h.b16 %v220
    %v606 = vunpack.c.l.b16 %v221
    %v607 = vunpack.c.h.b16 %v221
    %v608 = vunpack.c.l.b16 %v222
    %v609 = vunpack.c.h.b16 %v222
    %v610 = vunpack.c.l.b16 %v223
    %v611 = vunpack.c.h.b16 %v223
    %v612 = vunpack.c.l.b16 %v224
    %v613 = vunpack.c.h.b16 %v224
    %v614 = vunpack.c.l.b16 %v225
    %v615 = vunpack.c.h.b16 %v225
    %v616 = vunpack.c.l.b16 %v226
    %v617 = vunpack.c.h.b16 %v226
    %v618 = vunpack.c.l.b16 %v227
    %v619 = vunpack.c.h.b16 %v227
    %v620 = vunpack.c.l.b16 %v228
    %v621 = vunpack.c.h.b16 %v228
    %v622 = vunpack.c.l.b16 %v229
    %v623 = vunpack.c.h.b16 %v229
    %v624 = vunpack.c.l.b16 %v230
    %v625 = vunpack.c.h.b16 %v230
    %v626 = vunpack.c.l.b16 %v231
    %v627 = vunpack.c.h.b16 %v231
    %v628 = vpack.c.b16 %v374, %v372
    %v629 = vpack.c.b16 %v375, %v373
    %v630 = vpack.c.b16 %v378, %v376
    %v631 = vpack.c.b16 %v379, %v377
    %v632 = vpack.c.b16 %v382, %v380
    %v633 = vpack.c.b16 %v383, %v381
    %v634 = vpack.c.b16 %v386, %v384
    %v635 = vpack.c.b16 %v387, %v385
    %v636 = vpack.c.b16 %v390, %v388
    %v637 = vpack.c.b16 %v391, %v389
    %v638 = vpack.c.b16 %v394, %v392
    %v639 = vpack.c.b16 %v395, %v393
    %v640 = vpack.c.b16 %v398, %v396
    %v641 = vpack.c.b16 %v399, %v397
    %v642 = vpack.c.b16 %v402, %v400
    %v643 = vpack.c.b16 %v403, %v401
    %v644 = vpack.c.b16 %v406, %v404
    %v645 = vpack.c.b16 %v407, %v405
    %v646 = vpack.c.b16 %v410, %v408
    %v647 = vpack.c.b16 %v411, %v409
    %v648 = vpack.c.b16 %v414, %v412
    %v649 = vpack.c.b16 %v415, %v413
    %v650 = vpack.c.b16 %v418, %v416
    %v651 = vpack.c.b16 %v419, %v417
    %v652 = vpack.c.b16 %v422, %v420
    %v653 = vpack.c.b16 %v423, %v421
    %v654 = vpack.c.b16 %v426, %v424
    %v655 = vpack.c.b16 %v427, %v425
    %v656 = vpack.c.b16 %v430, %v428
    %v657 = vpack.c.b16 %v431, %v429
    %v658 = vpack.c.b16 %v434, %v432
    %v659 = vpack.c.b16 %v435, %v433
    %v660 = vpack.c.b16 %v438, %v436
    %v661 = vpack.c.b16 %v439, %v437
    %v662 = vpack.c.b16 %v442, %v440
    %v663 = vpack.c.b16 %v443, %v441
    %v664 = vpack.c.b16 %v446, %v444
    %v665 = vpack.c.b16 %v447, %v445
    %v666 = vpack.c.b16 %v450, %v448
    %v667 = vpack.c.b16 %v451, %v449
    %v668 = vpack.c.b16 %v454, %v452
    %v669 = vpack.c.b16 %v455, %v453
    %v670 = vpack.c.b16 %v458, %v456
    %v671 = vpack.c.b16 %v459, %v457
    %v672 = vpack.c.b16 %v462, %v460
    %v673 = vpack.c.b16 %v463, %v461
    %v674 = vpack.c.b16 %v466, %v464
    %v675 = vpack.c.b16 %v467, %v465
    %v676 = vpack.c.b16 %v470, %v468
    %v677 = vpack.c.b16 %v471, %v469
    %v678 = vpack.c.b16 %v474, %v472
    %v679 = vpack.c.b16 %v475, %v473
    %v680 = vpack.c.b16 %v478, %v476
    %v681 = vpack.c.b16 %v479, %v477
    %v682 = vpack.c.b16 %v482, %v480
    %v683 = vpack.c.b16 %v483, %v481
    %v684 = vpack.c.b16 %v486, %v484
    %v685 = vpack.c.b16 %v487, %v485
    %v686 = vpack.c.b16 %v490, %v488
    %v687 = vpack.c.b16 %v491, %v489
    %v688 = vpack.c.b16 %v494, %v492
    %v689 = vpack.c.b16 %v495, %v493
    %v690 = vpack.c.b16 %v498, %v496
    %v691 = vpack.c.b16 %v499, %v497
    %v692 = vpack.c.b16 %v502, %v500
    %v693 = vpack.c.b16 %v503, %v501
    %v694 = vpack.c.b16 %v506, %v504
    %v695 = vpack.c.b16 %v507, %v505
    %v696 = vpack.c.b16 %v510, %v508
    %v697 = vpack.c.b16 %v511, %v509
    %v698 = vpack.c.b16 %v514, %v512
    %v699 = vpack.c.b16 %v515, %v513
    %v700 = vpack.c.b16 %v518, %v516
    %v701 = vpack.c.b16 %v519, %v517
    %v702 = vpack.c.b16 %v522, %v520
    %v703 = vpack.c.b16 %v523, %v521
    %v704 = vpack.c.b16 %v526, %v524
    %v705 = vpack.c.b16 %v527, %v525
    %v706 = vpack.c.b16 %v530, %v528
    %v707 = vpack.c.b16 %v531, %v529
    %v708 = vpack.c.b16 %v534, %v532
    %v709 = vpack.c.b16 %v535, %v533
    %v710 = vpack.c.b16 %v538, %v536
    %v711 = vpack.c.b16 %v539, %v537
    %v712 = vpack.c.b16 %v542, %v540
    %v713 = vpack.c.b16 %v543, %v541
    %v714 = vpack.c.b16 %v546, %v544
    %v715 = vpack.c.b16 %v547, %v545
    %v716 = vpack.c.b16 %v550, %v548
    %v717 = vpack.c.b16 %v551, %v549
    %v718 = vpack.c.b16 %v554, %v552
    %v719 = vpack.c.b16 %v555, %v553
    %v720 = vpack.c.b16 %v558, %v556
    %v721 = vpack.c.b16 %v559, %v557
    %v722 = vpack.c.b16 %v562, %v560
    %v723 = vpack.c.b16 %v563, %v561
    %v724 = vpack.c.b16 %v566, %v564
    %v725 = vpack.c.b16 %v567, %v565
    %v726 = vpack.c.b16 %v570, %v568
    %v727 = vpack.c.b16 %v571, %v569
    %v728 = vpack.c.b16 %v574, %v572
    %v729 = vpack.c.b16 %v575, %v573
    %v730 = vpack.c.b16 %v578, %v576
    %v731 = vpack.c.b16 %v579, %v577
    %v732 = vpack.c.b16 %v582, %v580
    %v733 = vpack.c.b16 %v583, %v581
    %v734 = vpack.c.b16 %v586, %v584
    %v735 = vpack.c.b16 %v587, %v585
    %v736 = vpack.c.b16 %v590, %v588
    %v737 = vpack.c.b16 %v591, %v589
    %v738 = vpack.c.b16 %v594, %v592
    %v739 = vpack.c.b16 %v595, %v593
    %v740 = vpack.c.b16 %v598, %v596
    %v741 = vpack.c.b16 %v599, %v597
    %v742 = vpack.c.b16 %v602, %v600
    %v743 = vpack.c.b16 %v603, %v601
    %v744 = vpack.c.b16 %v606, %v604
    %v745 = vpack.c.b16 %v607, %v605
    %v746 = vpack.c.b16 %v610, %v608
    %v747 = vpack.c.b16 %v611, %v609
    %v748 = vpack.c.b16 %v614, %v612
    %v749 = vpack.c.b16 %v615, %v613
    %v750 = vpack.c.b16 %v618, %v616
    %v751 = vpack.c.b16 %v619, %v617
    %v752 = vpack.c.b16 %v622, %v620
    %v753 = vpack.c.b16 %v623, %v621
    %v754 = vpack.c.b16 %v626, %v624
    %v755 = vpack.c.b16 %v627, %v625
    %884 = vmatprep.subr.bf16.mxu0 %v629
    %885 = vmatpush1.bf16.msra.mxu0 %v628
    %886 = vmatprep.subr.bf16.mxu0 %v631
    %887 = vmatpush1.bf16.msra.mxu0 %v630
    %888 = vmatprep.subr.bf16.mxu0 %v633
    %889 = vmatpush1.bf16.msra.mxu0 %v632
    %890 = vmatprep.subr.bf16.mxu0 %v635
    %891 = vmatpush1.bf16.msra.mxu0 %v634
    %892 = vmatprep.subr.bf16.mxu0 %v637
    %893 = vmatpush1.bf16.msra.mxu0 %v636
    %894 = vmatprep.subr.bf16.mxu0 %v639
    %895 = vmatpush1.bf16.msra.mxu0 %v638
    %896 = vmatprep.subr.bf16.mxu0 %v641
    %897 = vmatpush1.bf16.msra.mxu0 %v640
    %898 = vmatprep.subr.bf16.mxu0 %v643
    %899 = vmatpush1.bf16.msra.mxu0 %v642
    %900 = vmatprep.subr.bf16.mxu0 %v645
    %901 = vmatpush1.bf16.msra.mxu0 %v644
    %902 = vmatprep.subr.bf16.mxu0 %v647
    %903 = vmatpush1.bf16.msra.mxu0 %v646
    %904 = vmatprep.subr.bf16.mxu0 %v649
    %905 = vmatpush1.bf16.msra.mxu0 %v648
    %906 = vmatprep.subr.bf16.mxu0 %v651
    %907 = vmatpush1.bf16.msra.mxu0 %v650
    %908 = vmatprep.subr.bf16.mxu0 %v653
    %909 = vmatpush1.bf16.msra.mxu0 %v652
    %910 = vmatprep.subr.bf16.mxu0 %v655
    %911 = vmatpush1.bf16.msra.mxu0 %v654
    %912 = vmatprep.subr.bf16.mxu0 %v657
    %913 = vmatpush1.bf16.msra.mxu0 %v656
    %914 = vmatprep.subr.bf16.mxu0 %v659
    %915 = vmatpush1.bf16.msra.mxu0 %v658
    %916 = vmatprep.mubr.bf16.mxu0 %v97
    %917 = vmatmul.mubr.bf16.gmra.mrb[0].mxu0 %v96
    %v918 = vpop.f32.mrb[0].mxu0
    %v919 = vadd.f32 %v237, %v918
    %v920 = vpop.f32.mrb[0].mxu0
    %v921 = vadd.f32 %v241, %v920
    %v922 = vpop.f32.mrb[0].mxu0
    %v923 = vadd.f32 %v237, %v922
    %v924 = vpop.f32.mrb[0].mxu0
    %v925 = vadd.f32 %v241, %v924
    %926 = vdwg.mxu0
    %927 = vmatprep.subr.bf16.mxu0 %v661
    %928 = vmatpush1.bf16.msra.mxu0 %v660
    %929 = vmatprep.subr.bf16.mxu0 %v663
    %930 = vmatpush1.bf16.msra.mxu0 %v662
    %931 = vmatprep.subr.bf16.mxu0 %v665
    %932 = vmatpush1.bf16.msra.mxu0 %v664
    %933 = vmatprep.subr.bf16.mxu0 %v667
    %934 = vmatpush1.bf16.msra.mxu0 %v666
    %935 = vmatprep.subr.bf16.mxu0 %v669
    %936 = vmatpush1.bf16.msra.mxu0 %v668
    %937 = vmatprep.subr.bf16.mxu0 %v671
    %938 = vmatpush1.bf16.msra.mxu0 %v670
    %939 = vmatprep.subr.bf16.mxu0 %v673
    %940 = vmatpush1.bf16.msra.mxu0 %v672
    %941 = vmatprep.subr.bf16.mxu0 %v675
    %942 = vmatpush1.bf16.msra.mxu0 %v674
    %943 = vmatprep.subr.bf16.mxu0 %v677
    %944 = vmatpush1.bf16.msra.mxu0 %v676
    %945 = vmatprep.subr.bf16.mxu0 %v679
    %946 = vmatpush1.bf16.msra.mxu0 %v678
    %947 = vmatprep.subr.bf16.mxu0 %v681
    %948 = vmatpush1.bf16.msra.mxu0 %v680
    %949 = vmatprep.subr.bf16.mxu0 %v683
    %950 = vmatpush1.bf16.msra.mxu0 %v682
    %951 = vmatprep.subr.bf16.mxu0 %v685
    %952 = vmatpush1.bf16.msra.mxu0 %v684
    %953 = vmatprep.subr.bf16.mxu0 %v687
    %954 = vmatpush1.bf16.msra.mxu0 %v686
    %955 = vmatprep.subr.bf16.mxu0 %v689
    %956 = vmatpush1.bf16.msra.mxu0 %v688
    %957 = vmatprep.subr.bf16.mxu0 %v691
    %958 = vmatpush1.bf16.msra.mxu0 %v690
    %959 = vmatprep.mubr.bf16.mxu0 %v99
    %960 = vmatmul.mubr.bf16.gmra.mrb[0].mxu0 %v98
    %v961 = vpop.f32.mrb[0].mxu0
    %v962 = vadd.f32 %v919, %v961
    %v963 = vpop.f32.mrb[0].mxu0
    %v964 = vadd.f32 %v921, %v963
    %v965 = vpop.f32.mrb[0].mxu0
    %v966 = vadd.f32 %v923, %v965
    %v967 = vpop.f32.mrb[0].mxu0
    %v968 = vadd.f32 %v925, %v967
    %969 = vdwg.mxu0
    %970 = vmatprep.subr.bf16.mxu0 %v693
    %971 = vmatpush1.bf16.msra.mxu0 %v692
    %972 = vmatprep.subr.bf16.mxu0 %v695
    %973 = vmatpush1.bf16.msra.mxu0 %v694
    %974 = vmatprep.subr.bf16.mxu0 %v697
    %975 = vmatpush1.bf16.msra.mxu0 %v696
    %976 = vmatprep.subr.bf16.mxu0 %v699
    %977 = vmatpush1.bf16.msra.mxu0 %v698
    %978 = vmatprep.subr.bf16.mxu0 %v701
    %979 = vmatpush1.bf16.msra.mxu0 %v700
    %980 = vmatprep.subr.bf16.mxu0 %v703
    %981 = vmatpush1.bf16.msra.mxu0 %v702
    %982 = vmatprep.subr.bf16.mxu0 %v705
    %983 = vmatpush1.bf16.msra.mxu0 %v704
    %984 = vmatprep.subr.bf16.mxu0 %v707
    %985 = vmatpush1.bf16.msra.mxu0 %v706
    %986 = vmatprep.subr.bf16.mxu0 %v709
    %987 = vmatpush1.bf16.msra.mxu0 %v708
    %988 = vmatprep.subr.bf16.mxu0 %v711
    %989 = vmatpush1.bf16.msra.mxu0 %v710
    %990 = vmatprep.subr.bf16.mxu0 %v713
    %991 = vmatpush1.bf16.msra.mxu0 %v712
    %992 = vmatprep.subr.bf16.mxu0 %v715
    %993 = vmatpush1.bf16.msra.mxu0 %v714
    %994 = vmatprep.subr.bf16.mxu0 %v717
    %995 = vmatpush1.bf16.msra.mxu0 %v716
    %996 = vmatprep.subr.bf16.mxu0 %v719
    %997 = vmatpush1.bf16.msra.mxu0 %v718
    %998 = vmatprep.subr.bf16.mxu0 %v721
    %999 = vmatpush1.bf16.msra.mxu0 %v720
    %1000 = vmatprep.subr.bf16.mxu0 %v723
    %1001 = vmatpush1.bf16.msra.mxu0 %v722
    %1002 = vmatprep.mubr.bf16.mxu0 %v101
    %1003 = vmatmul.mubr.bf16.gmra.mrb[0].mxu0 %v100
    %v1004 = vpop.f32.mrb[0].mxu0
    %v1005 = vadd.f32 %v962, %v1004
    %v1006 = vpop.f32.mrb[0].mxu0
    %v1007 = vadd.f32 %v964, %v1006
    %v1008 = vpop.f32.mrb[0].mxu0
    %v1009 = vadd.f32 %v966, %v1008
    %v1010 = vpop.f32.mrb[0].mxu0
    %v1011 = vadd.f32 %v968, %v1010
    %1012 = vdwg.mxu0
    %1013 = vmatprep.subr.bf16.mxu0 %v725
    %1014 = vmatpush1.bf16.msra.mxu0 %v724
    %1015 = vmatprep.subr.bf16.mxu0 %v727
    %1016 = vmatpush1.bf16.msra.mxu0 %v726
    %1017 = vmatprep.subr.bf16.mxu0 %v729
    %1018 = vmatpush1.bf16.msra.mxu0 %v728
    %1019 = vmatprep.subr.bf16.mxu0 %v731
    %1020 = vmatpush1.bf16.msra.mxu0 %v730
    %1021 = vmatprep.subr.bf16.mxu0 %v733
    %1022 = vmatpush1.bf16.msra.mxu0 %v732
    %1023 = vmatprep.subr.bf16.mxu0 %v735
    %1024 = vmatpush1.bf16.msra.mxu0 %v734
    %1025 = vmatprep.subr.bf16.mxu0 %v737
    %1026 = vmatpush1.bf16.msra.mxu0 %v736
    %1027 = vmatprep.subr.bf16.mxu0 %v739
    %1028 = vmatpush1.bf16.msra.mxu0 %v738
    %1029 = vmatprep.subr.bf16.mxu0 %v741
    %1030 = vmatpush1.bf16.msra.mxu0 %v740
    %1031 = vmatprep.subr.bf16.mxu0 %v743
    %1032 = vmatpush1.bf16.msra.mxu0 %v742
    %1033 = vmatprep.subr.bf16.mxu0 %v745
    %1034 = vmatpush1.bf16.msra.mxu0 %v744
    %1035 = vmatprep.subr.bf16.mxu0 %v747
    %1036 = vmatpush1.bf16.msra.mxu0 %v746
    %1037 = vmatprep.subr.bf16.mxu0 %v749
    %1038 = vmatpush1.bf16.msra.mxu0 %v748
    %1039 = vmatprep.subr.bf16.mxu0 %v751
    %1040 = vmatpush1.bf16.msra.mxu0 %v750
    %1041 = vmatprep.subr.bf16.mxu0 %v753
    %1042 = vmatpush1.bf16.msra.mxu0 %v752
    %1043 = vmatprep.subr.bf16.mxu0 %v755
    %1044 = vmatpush1.bf16.msra.mxu0 %v754
    %1045 = vmatprep.mubr.bf16.mxu0 %v103
    %1046 = vmatmul.mubr.bf16.gmra.mrb[0].mxu0 %v102
    %v1047 = vpop.f32.mrb[0].mxu0
    %v1048 = vadd.f32 %v1005, %v1047
    %v1049 = vpop.f32.mrb[0].mxu0
    %v1050 = vadd.f32 %v1007, %v1049
    %v1051 = vpop.f32.mrb[0].mxu0
    %v1052 = vadd.f32 %v1009, %v1051
    %v1053 = vpop.f32.mrb[0].mxu0
    %v1054 = vadd.f32 %v1011, %v1053
    %1055 = vdwg.mxu0
    %v1056 = vpack.c.bf16 %v1052, %v1048
    %v1057 = vpack.c.bf16 %v1054, %v1050
    %v1058 = vld [vmem:[#allocation7] sm:$0xff]
    %v1059 = vld [vmem:[#allocation7 + $0x8] sm:$0xff]
    %v1060 = vld [vmem:[#allocation7 + $0x10] sm:$0xff]
    %v1061 = vld [vmem:[#allocation7 + $0x18] sm:$0xff]
    %v1062 = vld [vmem:[#allocation7 + $0x20] sm:$0xff]
    %v1063 = vld [vmem:[#allocation7 + $0x28] sm:$0xff]
    %v1064 = vld [vmem:[#allocation7 + $0x30] sm:$0xff]
    %v1065 = vld [vmem:[#allocation7 + $0x38] sm:$0xff]
    %v1066 = vld [vmem:[#allocation7 + $0x40] sm:$0xff]
    %v1067 = vld [vmem:[#allocation7 + $0x48] sm:$0xff]
    %v1068 = vld [vmem:[#allocation7 + $0x50] sm:$0xff]
    %v1069 = vld [vmem:[#allocation7 + $0x58] sm:$0xff]
    %v1070 = vld [vmem:[#allocation7 + $0x60] sm:$0xff]
    %v1071 = vld [vmem:[#allocation7 + $0x68] sm:$0xff]
    %v1072 = vld [vmem:[#allocation7 + $0x70] sm:$0xff]
    %v1073 = vld [vmem:[#allocation7 + $0x78] sm:$0xff]
    %v1074 = vld [vmem:[#allocation7 + $0x80] sm:$0xff]
    %v1075 = vld [vmem:[#allocation7 + $0x88] sm:$0xff]
    %v1076 = vld [vmem:[#allocation7 + $0x90] sm:$0xff]
    %v1077 = vld [vmem:[#allocation7 + $0x98] sm:$0xff]
    %v1078 = vld [vmem:[#allocation7 + $0xa0] sm:$0xff]
    %v1079 = vld [vmem:[#allocation7 + $0xa8] sm:$0xff]
    %v1080 = vld [vmem:[#allocation7 + $0xb0] sm:$0xff]
    %v1081 = vld [vmem:[#allocation7 + $0xb8] sm:$0xff]
    %v1082 = vld [vmem:[#allocation7 + $0xc0] sm:$0xff]
    %v1083 = vld [vmem:[#allocation7 + $0xc8] sm:$0xff]
    %v1084 = vld [vmem:[#allocation7 + $0xd0] sm:$0xff]
    %v1085 = vld [vmem:[#allocation7 + $0xd8] sm:$0xff]
    %v1086 = vld [vmem:[#allocation7 + $0xe0] sm:$0xff]
    %v1087 = vld [vmem:[#allocation7 + $0xe8] sm:$0xff]
    %v1088 = vld [vmem:[#allocation7 + $0xf0] sm:$0xff]
    %v1089 = vld [vmem:[#allocation7 + $0xf8] sm:$0xff]
    %v1090 = vld [vmem:[#allocation7 + $0x100] sm:$0xff]
    %v1091 = vld [vmem:[#allocation7 + $0x108] sm:$0xff]
    %v1092 = vld [vmem:[#allocation7 + $0x110] sm:$0xff]
    %v1093 = vld [vmem:[#allocation7 + $0x118] sm:$0xff]
    %v1094 = vld [vmem:[#allocation7 + $0x120] sm:$0xff]
    %v1095 = vld [vmem:[#allocation7 + $0x128] sm:$0xff]
    %v1096 = vld [vmem:[#allocation7 + $0x130] sm:$0xff]
    %v1097 = vld [vmem:[#allocation7 + $0x138] sm:$0xff]
    %v1098 = vld [vmem:[#allocation7 + $0x140] sm:$0xff]
    %v1099 = vld [vmem:[#allocation7 + $0x148] sm:$0xff]
    %v1100 = vld [vmem:[#allocation7 + $0x150] sm:$0xff]
    %v1101 = vld [vmem:[#allocation7 + $0x158] sm:$0xff]
    %v1102 = vld [vmem:[#allocation7 + $0x160] sm:$0xff]
    %v1103 = vld [vmem:[#allocation7 + $0x168] sm:$0xff]
    %v1104 = vld [vmem:[#allocation7 + $0x170] sm:$0xff]
    %v1105 = vld [vmem:[#allocation7 + $0x178] sm:$0xff]
    %v1106 = vld [vmem:[#allocation7 + $0x180] sm:$0xff]
    %v1107 = vld [vmem:[#allocation7 + $0x188] sm:$0xff]
    %v1108 = vld [vmem:[#allocation7 + $0x190] sm:$0xff]
    %v1109 = vld [vmem:[#allocation7 + $0x198] sm:$0xff]
    %v1110 = vld [vmem:[#allocation7 + $0x1a0] sm:$0xff]
    %v1111 = vld [vmem:[#allocation7 + $0x1a8] sm:$0xff]
    %v1112 = vld [vmem:[#allocation7 + $0x1b0] sm:$0xff]
    %v1113 = vld [vmem:[#allocation7 + $0x1b8] sm:$0xff]
    %v1114 = vld [vmem:[#allocation7 + $0x1c0] sm:$0xff]
    %v1115 = vld [vmem:[#allocation7 + $0x1c8] sm:$0xff]
    %v1116 = vld [vmem:[#allocation7 + $0x1d0] sm:$0xff]
    %v1117 = vld [vmem:[#allocation7 + $0x1d8] sm:$0xff]
    %v1118 = vld [vmem:[#allocation7 + $0x1e0] sm:$0xff]
    %v1119 = vld [vmem:[#allocation7 + $0x1e8] sm:$0xff]
    %v1120 = vld [vmem:[#allocation7 + $0x1f0] sm:$0xff]
    %v1121 = vld [vmem:[#allocation7 + $0x1f8] sm:$0xff]
    %v1122 = vld [vmem:[%s4] sm:$0xf]
    %v1124 = vlaneseq
    %v1125 = vshrl.u32 %v1124, 7
    %v1126 = vsub.s32 0, %v1125
    %v1127 = vrot.slane %v1122, %v1126
    %v1128 = vlaneseq
    %v1129 = vshrl.u32 %v1128, 7
    %v1130 = vsub.s32 1, %v1129
    %v1131 = vrot.slane %v1122, %v1130
    %v1132 = vlaneseq
    %v1133 = vshrl.u32 %v1132, 7
    %v1134 = vsub.s32 2, %v1133
    %v1135 = vrot.slane %v1122, %v1134
    %v1136 = vlaneseq
    %v1137 = vshrl.u32 %v1136, 7
    %v1138 = vsub.s32 3, %v1137
    %v1139 = vrot.slane %v1122, %v1138
    %v1208 = vunpack.c.l.b16 %v1058
    %v1209 = vunpack.c.h.b16 %v1058
    %v1210 = vunpack.c.l.b16 %v1059
    %v1211 = vunpack.c.h.b16 %v1059
    %v1212 = vunpack.c.l.b16 %v1060
    %v1213 = vunpack.c.h.b16 %v1060
    %v1214 = vunpack.c.l.b16 %v1061
    %v1215 = vunpack.c.h.b16 %v1061
    %v1216 = vunpack.c.l.b16 %v1062
    %v1217 = vunpack.c.h.b16 %v1062
    %v1218 = vunpack.c.l.b16 %v1063
    %v1219 = vunpack.c.h.b16 %v1063
    %v1220 = vunpack.c.l.b16 %v1064
    %v1221 = vunpack.c.h.b16 %v1064
    %v1222 = vunpack.c.l.b16 %v1065
    %v1223 = vunpack.c.h.b16 %v1065
    %v1224 = vunpack.c.l.b16 %v1066
    %v1225 = vunpack.c.h.b16 %v1066
    %v1226 = vunpack.c.l.b16 %v1067
    %v1227 = vunpack.c.h.b16 %v1067
    %v1228 = vunpack.c.l.b16 %v1068
    %v1229 = vunpack.c.h.b16 %v1068
    %v1230 = vunpack.c.l.b16 %v1069
    %v1231 = vunpack.c.h.b16 %v1069
    %v1232 = vunpack.c.l.b16 %v1070
    %v1233 = vunpack.c.h.b16 %v1070
    %v1234 = vunpack.c.l.b16 %v1071
    %v1235 = vunpack.c.h.b16 %v1071
    %v1236 = vunpack.c.l.b16 %v1072
    %v1237 = vunpack.c.h.b16 %v1072
    %v1238 = vunpack.c.l.b16 %v1073
    %v1239 = vunpack.c.h.b16 %v1073
    %v1240 = vunpack.c.l.b16 %v1074
    %v1241 = vunpack.c.h.b16 %v1074
    %v1242 = vunpack.c.l.b16 %v1075
    %v1243 = vunpack.c.h.b16 %v1075
    %v1244 = vunpack.c.l.b16 %v1076
    %v1245 = vunpack.c.h.b16 %v1076
    %v1246 = vunpack.c.l.b16 %v1077
    %v1247 = vunpack.c.h.b16 %v1077
    %v1248 = vunpack.c.l.b16 %v1078
    %v1249 = vunpack.c.h.b16 %v1078
    %v1250 = vunpack.c.l.b16 %v1079
    %v1251 = vunpack.c.h.b16 %v1079
    %v1252 = vunpack.c.l.b16 %v1080
    %v1253 = vunpack.c.h.b16 %v1080
    %v1254 = vunpack.c.l.b16 %v1081
    %v1255 = vunpack.c.h.b16 %v1081
    %v1256 = vunpack.c.l.b16 %v1082
    %v1257 = vunpack.c.h.b16 %v1082
    %v1258 = vunpack.c.l.b16 %v1083
    %v1259 = vunpack.c.h.b16 %v1083
    %v1260 = vunpack.c.l.b16 %v1084
    %v1261 = vunpack.c.h.b16 %v1084
    %v1262 = vunpack.c.l.b16 %v1085
    %v1263 = vunpack.c.h.b16 %v1085
    %v1264 = vunpack.c.l.b16 %v1086
    %v1265 = vunpack.c.h.b16 %v1086
    %v1266 = vunpack.c.l.b16 %v1087
    %v1267 = vunpack.c.h.b16 %v1087
    %v1268 = vunpack.c.l.b16 %v1088
    %v1269 = vunpack.c.h.b16 %v1088
    %v1270 = vunpack.c.l.b16 %v1089
    %v1271 = vunpack.c.h.b16 %v1089
    %v1272 = vunpack.c.l.b16 %v1090
    %v1273 = vunpack.c.h.b16 %v1090
    %v1274 = vunpack.c.l.b16 %v1091
    %v1275 = vunpack.c.h.b16 %v1091
    %v1276 = vunpack.c.l.b16 %v1092
    %v1277 = vunpack.c.h.b16 %v1092
    %v1278 = vunpack.c.l.b16 %v1093
    %v1279 = vunpack.c.h.b16 %v1093
    %v1280 = vunpack.c.l.b16 %v1094
    %v1281 = vunpack.c.h.b16 %v1094
    %v1282 = vunpack.c.l.b16 %v1095
    %v1283 = vunpack.c.h.b16 %v1095
    %v1284 = vunpack.c.l.b16 %v1096
    %v1285 = vunpack.c.h.b16 %v1096
    %v1286 = vunpack.c.l.b16 %v1097
    %v1287 = vunpack.c.h.b16 %v1097
    %v1288 = vunpack.c.l.b16 %v1098
    %v1289 = vunpack.c.h.b16 %v1098
    %v1290 = vunpack.c.l.b16 %v1099
    %v1291 = vunpack.c.h.b16 %v1099
    %v1292 = vunpack.c.l.b16 %v1100
    %v1293 = vunpack.c.h.b16 %v1100
    %v1294 = vunpack.c.l.b16 %v1101
    %v1295 = vunpack.c.h.b16 %v1101
    %v1296 = vunpack.c.l.b16 %v1102
    %v1297 = vunpack.c.h.b16 %v1102
    %v1298 = vunpack.c.l.b16 %v1103
    %v1299 = vunpack.c.h.b16 %v1103
    %v1300 = vunpack.c.l.b16 %v1104
    %v1301 = vunpack.c.h.b16 %v1104
    %v1302 = vunpack.c.l.b16 %v1105
    %v1303 = vunpack.c.h.b16 %v1105
    %v1304 = vunpack.c.l.b16 %v1106
    %v1305 = vunpack.c.h.b16 %v1106
    %v1306 = vunpack.c.l.b16 %v1107
    %v1307 = vunpack.c.h.b16 %v1107
    %v1308 = vunpack.c.l.b16 %v1108
    %v1309 = vunpack.c.h.b16 %v1108
    %v1310 = vunpack.c.l.b16 %v1109
    %v1311 = vunpack.c.h.b16 %v1109
    %v1312 = vunpack.c.l.b16 %v1110
    %v1313 = vunpack.c.h.b16 %v1110
    %v1314 = vunpack.c.l.b16 %v1111
    %v1315 = vunpack.c.h.b16 %v1111
    %v1316 = vunpack.c.l.b16 %v1112
    %v1317 = vunpack.c.h.b16 %v1112
    %v1318 = vunpack.c.l.b16 %v1113
    %v1319 = vunpack.c.h.b16 %v1113
    %v1320 = vunpack.c.l.b16 %v1114
    %v1321 = vunpack.c.h.b16 %v1114
    %v1322 = vunpack.c.l.b16 %v1115
    %v1323 = vunpack.c.h.b16 %v1115
    %v1324 = vunpack.c.l.b16 %v1116
    %v1325 = vunpack.c.h.b16 %v1116
    %v1326 = vunpack.c.l.b16 %v1117
    %v1327 = vunpack.c.h.b16 %v1117
    %v1328 = vunpack.c.l.b16 %v1118
    %v1329 = vunpack.c.h.b16 %v1118
    %v1330 = vunpack.c.l.b16 %v1119
    %v1331 = vunpack.c.h.b16 %v1119
    %v1332 = vunpack.c.l.b16 %v1120
    %v1333 = vunpack.c.h.b16 %v1120
    %v1334 = vunpack.c.l.b16 %v1121
    %v1335 = vunpack.c.h.b16 %v1121
    %v1336 = vpack.c.b16 %v1212, %v1208
    %v1337 = vpack.c.b16 %v1213, %v1209
    %v1338 = vpack.c.b16 %v1214, %v1210
    %v1339 = vpack.c.b16 %v1215, %v1211
    %v1340 = vpack.c.b16 %v1220, %v1216
    %v1341 = vpack.c.b16 %v1221, %v1217
    %v1342 = vpack.c.b16 %v1222, %v1218
    %v1343 = vpack.c.b16 %v1223, %v1219
    %v1344 = vpack.c.b16 %v1228, %v1224
    %v1345 = vpack.c.b16 %v1229, %v1225
    %v1346 = vpack.c.b16 %v1230, %v1226
    %v1347 = vpack.c.b16 %v1231, %v1227
    %v1348 = vpack.c.b16 %v1236, %v1232
    %v1349 = vpack.c.b16 %v1237, %v1233
    %v1350 = vpack.c.b16 %v1238, %v1234
    %v1351 = vpack.c.b16 %v1239, %v1235
    %v1352 = vpack.c.b16 %v1244, %v1240
    %v1353 = vpack.c.b16 %v1245, %v1241
    %v1354 = vpack.c.b16 %v1246, %v1242
    %v1355 = vpack.c.b16 %v1247, %v1243
    %v1356 = vpack.c.b16 %v1252, %v1248
    %v1357 = vpack.c.b16 %v1253, %v1249
    %v1358 = vpack.c.b16 %v1254, %v1250
    %v1359 = vpack.c.b16 %v1255, %v1251
    %v1360 = vpack.c.b16 %v1260, %v1256
    %v1361 = vpack.c.b16 %v1261, %v1257
    %v1362 = vpack.c.b16 %v1262, %v1258
    %v1363 = vpack.c.b16 %v1263, %v1259
    %v1364 = vpack.c.b16 %v1268, %v1264
    %v1365 = vpack.c.b16 %v1269, %v1265
    %v1366 = vpack.c.b16 %v1270, %v1266
    %v1367 = vpack.c.b16 %v1271, %v1267
    %v1368 = vpack.c.b16 %v1276, %v1272
    %v1369 = vpack.c.b16 %v1277, %v1273
    %v1370 = vpack.c.b16 %v1278, %v1274
    %v1371 = vpack.c.b16 %v1279, %v1275
    %v1372 = vpack.c.b16 %v1284, %v1280
    %v1373 = vpack.c.b16 %v1285, %v1281
    %v1374 = vpack.c.b16 %v1286, %v1282
    %v1375 = vpack.c.b16 %v1287, %v1283
    %v1376 = vpack.c.b16 %v1292, %v1288
    %v1377 = vpack.c.b16 %v1293, %v1289
    %v1378 = vpack.c.b16 %v1294, %v1290
    %v1379 = vpack.c.b16 %v1295, %v1291
    %v1380 = vpack.c.b16 %v1300, %v1296
    %v1381 = vpack.c.b16 %v1301, %v1297
    %v1382 = vpack.c.b16 %v1302, %v1298
    %v1383 = vpack.c.b16 %v1303, %v1299
    %v1384 = vpack.c.b16 %v1308, %v1304
    %v1385 = vpack.c.b16 %v1309, %v1305
    %v1386 = vpack.c.b16 %v1310, %v1306
    %v1387 = vpack.c.b16 %v1311, %v1307
    %v1388 = vpack.c.b16 %v1316, %v1312
    %v1389 = vpack.c.b16 %v1317, %v1313
    %v1390 = vpack.c.b16 %v1318, %v1314
    %v1391 = vpack.c.b16 %v1319, %v1315
    %v1392 = vpack.c.b16 %v1324, %v1320
    %v1393 = vpack.c.b16 %v1325, %v1321
    %v1394 = vpack.c.b16 %v1326, %v1322
    %v1395 = vpack.c.b16 %v1327, %v1323
    %v1396 = vpack.c.b16 %v1332, %v1328
    %v1397 = vpack.c.b16 %v1333, %v1329
    %v1398 = vpack.c.b16 %v1334, %v1330
    %v1399 = vpack.c.b16 %v1335, %v1331
    %1464 = vmatprep.subr.bf16.mxu0 %v1337
    %1465 = vmatpush1.bf16.msra.mxu0 %v1336
    %1466 = vmatprep.subr.bf16.mxu0 %v1341
    %1467 = vmatpush1.bf16.msra.mxu0 %v1340
    %1468 = vmatprep.subr.bf16.mxu0 %v1345
    %1469 = vmatpush1.bf16.msra.mxu0 %v1344
    %1470 = vmatprep.subr.bf16.mxu0 %v1349
    %1471 = vmatpush1.bf16.msra.mxu0 %v1348
    %1472 = vmatprep.subr.bf16.mxu0 %v1353
    %1473 = vmatpush1.bf16.msra.mxu0 %v1352
    %1474 = vmatprep.subr.bf16.mxu0 %v1357
    %1475 = vmatpush1.bf16.msra.mxu0 %v1356
    %1476 = vmatprep.subr.bf16.mxu0 %v1361
    %1477 = vmatpush1.bf16.msra.mxu0 %v1360
    %1478 = vmatprep.subr.bf16.mxu0 %v1365
    %1479 = vmatpush1.bf16.msra.mxu0 %v1364
    %1480 = vmatprep.subr.bf16.mxu0 %v1369
    %1481 = vmatpush1.bf16.msra.mxu0 %v1368
    %1482 = vmatprep.subr.bf16.mxu0 %v1373
    %1483 = vmatpush1.bf16.msra.mxu0 %v1372
    %1484 = vmatprep.subr.bf16.mxu0 %v1377
    %1485 = vmatpush1.bf16.msra.mxu0 %v1376
    %1486 = vmatprep.subr.bf16.mxu0 %v1381
    %1487 = vmatpush1.bf16.msra.mxu0 %v1380
    %1488 = vmatprep.subr.bf16.mxu0 %v1385
    %1489 = vmatpush1.bf16.msra.mxu0 %v1384
    %1490 = vmatprep.subr.bf16.mxu0 %v1389
    %1491 = vmatpush1.bf16.msra.mxu0 %v1388
    %1492 = vmatprep.subr.bf16.mxu0 %v1393
    %1493 = vmatpush1.bf16.msra.mxu0 %v1392
    %1494 = vmatprep.subr.bf16.mxu0 %v1397
    %1495 = vmatpush1.bf16.msra.mxu0 %v1396
    %1496 = vmatprep.mubr.bf16.mxu0 %v1057
    %1497 = vmatmul.mubr.bf16.gmra.mrb[0].mxu0 %v1056
    %v1498 = vpop.f32.mrb[0].mxu0
    %v1499 = vadd.f32 %v1127, %v1498
    %v1500 = vpop.f32.mrb[0].mxu0
    %v1501 = vadd.f32 %v1131, %v1500
    %v1502 = vpop.f32.mrb[0].mxu0
    %v1503 = vadd.f32 %v1127, %v1502
    %v1504 = vpop.f32.mrb[0].mxu0
    %v1505 = vadd.f32 %v1131, %v1504
    %1506 = vdwg.mxu0
    %1507 = vmatprep.subr.bf16.mxu0 %v1339
    %1508 = vmatpush1.bf16.msra.mxu0 %v1338
    %1509 = vmatprep.subr.bf16.mxu0 %v1343
    %1510 = vmatpush1.bf16.msra.mxu0 %v1342
    %1511 = vmatprep.subr.bf16.mxu0 %v1347
    %1512 = vmatpush1.bf16.msra.mxu0 %v1346
    %1513 = vmatprep.subr.bf16.mxu0 %v1351
    %1514 = vmatpush1.bf16.msra.mxu0 %v1350
    %1515 = vmatprep.subr.bf16.mxu0 %v1355
    %1516 = vmatpush1.bf16.msra.mxu0 %v1354
    %1517 = vmatprep.subr.bf16.mxu0 %v1359
    %1518 = vmatpush1.bf16.msra.mxu0 %v1358
    %1519 = vmatprep.subr.bf16.mxu0 %v1363
    %1520 = vmatpush1.bf16.msra.mxu0 %v1362
    %1521 = vmatprep.subr.bf16.mxu0 %v1367
    %1522 = vmatpush1.bf16.msra.mxu0 %v1366
    %1523 = vmatprep.subr.bf16.mxu0 %v1371
    %1524 = vmatpush1.bf16.msra.mxu0 %v1370
    %1525 = vmatprep.subr.bf16.mxu0 %v1375
    %1526 = vmatpush1.bf16.msra.mxu0 %v1374
    %1527 = vmatprep.subr.bf16.mxu0 %v1379
    %1528 = vmatpush1.bf16.msra.mxu0 %v1378
    %1529 = vmatprep.subr.bf16.mxu0 %v1383
    %1530 = vmatpush1.bf16.msra.mxu0 %v1382
    %1531 = vmatprep.subr.bf16.mxu0 %v1387
    %1532 = vmatpush1.bf16.msra.mxu0 %v1386
    %1533 = vmatprep.subr.bf16.mxu0 %v1391
    %1534 = vmatpush1.bf16.msra.mxu0 %v1390
    %1535 = vmatprep.subr.bf16.mxu0 %v1395
    %1536 = vmatpush1.bf16.msra.mxu0 %v1394
    %1537 = vmatprep.subr.bf16.mxu0 %v1399
    %1538 = vmatpush1.bf16.msra.mxu0 %v1398
    %1539 = vmatprep.mubr.bf16.mxu0 %v1057
    %1540 = vmatmul.mubr.bf16.gmra.mrb[0].mxu0 %v1056
    %v1541 = vpop.f32.mrb[0].mxu0
    %v1542 = vadd.f32 %v1135, %v1541
    %v1543 = vpop.f32.mrb[0].mxu0
    %v1544 = vadd.f32 %v1139, %v1543
    %v1545 = vpop.f32.mrb[0].mxu0
    %v1546 = vadd.f32 %v1135, %v1545
    %v1547 = vpop.f32.mrb[0].mxu0
    %v1548 = vadd.f32 %v1139, %v1547
    %1549 = vdwg.mxu0
    %v1550 = vpack.c.bf16 %v1503, %v1499
    %v1551 = vpack.c.bf16 %v1505, %v1501
    %v1552 = vpack.c.bf16 %v1546, %v1542
    %v1553 = vpack.c.bf16 %v1548, %v1544
    %v1554 = vld [vmem:[#allocation8] sm:$0xf]
    %v1555 = vld [vmem:[#allocation8 + $0x4] sm:$0xf]
    %v1556 = vld [vmem:[#allocation8 + $0x8] sm:$0xf]
    %v1557 = vld [vmem:[#allocation8 + $0xc] sm:$0xf]
    %v1558 = vld [vmem:[#allocation8 + $0x10] sm:$0xf]
    %v1559 = vld [vmem:[#allocation8 + $0x14] sm:$0xf]
    %v1560 = vld [vmem:[#allocation8 + $0x18] sm:$0xf]
    %v1561 = vld [vmem:[#allocation8 + $0x1c] sm:$0xf]
    %v1562 = vld [vmem:[#allocation8 + $0x20] sm:$0xf]
    %v1563 = vld [vmem:[#allocation8 + $0x24] sm:$0xf]
    %v1564 = vld [vmem:[#allocation8 + $0x28] sm:$0xf]
    %v1565 = vld [vmem:[#allocation8 + $0x2c] sm:$0xf]
    %v1566 = vld [vmem:[#allocation8 + $0x30] sm:$0xf]
    %v1567 = vld [vmem:[#allocation8 + $0x34] sm:$0xf]
    %v1568 = vld [vmem:[#allocation8 + $0x38] sm:$0xf]
    %v1569 = vld [vmem:[#allocation8 + $0x3c] sm:$0xf]
    %v1570 = vld [vmem:[#allocation8 + $0x40] sm:$0xf]
    %v1571 = vld [vmem:[#allocation8 + $0x44] sm:$0xf]
    %v1572 = vld [vmem:[#allocation8 + $0x48] sm:$0xf]
    %v1573 = vld [vmem:[#allocation8 + $0x4c] sm:$0xf]
    %v1574 = vld [vmem:[#allocation8 + $0x50] sm:$0xf]
    %v1575 = vld [vmem:[#allocation8 + $0x54] sm:$0xf]
    %v1576 = vld [vmem:[#allocation8 + $0x58] sm:$0xf]
    %v1577 = vld [vmem:[#allocation8 + $0x5c] sm:$0xf]
    %v1578 = vld [vmem:[#allocation8 + $0x60] sm:$0xf]
    %v1579 = vld [vmem:[#allocation8 + $0x64] sm:$0xf]
    %v1580 = vld [vmem:[#allocation8 + $0x68] sm:$0xf]
    %v1581 = vld [vmem:[#allocation8 + $0x6c] sm:$0xf]
    %v1582 = vld [vmem:[#allocation8 + $0x70] sm:$0xf]
    %v1583 = vld [vmem:[#allocation8 + $0x74] sm:$0xf]
    %v1584 = vld [vmem:[#allocation8 + $0x78] sm:$0xf]
    %v1585 = vld [vmem:[#allocation8 + $0x7c] sm:$0xf]
    %v1586 = vld [vmem:[#allocation8 + $0x80] sm:$0xf]
    %v1587 = vld [vmem:[#allocation8 + $0x84] sm:$0xf]
    %v1588 = vld [vmem:[#allocation8 + $0x88] sm:$0xf]
    %v1589 = vld [vmem:[#allocation8 + $0x8c] sm:$0xf]
    %v1590 = vld [vmem:[#allocation8 + $0x90] sm:$0xf]
    %v1591 = vld [vmem:[#allocation8 + $0x94] sm:$0xf]
    %v1592 = vld [vmem:[#allocation8 + $0x98] sm:$0xf]
    %v1593 = vld [vmem:[#allocation8 + $0x9c] sm:$0xf]
    %v1594 = vld [vmem:[#allocation8 + $0xa0] sm:$0xf]
    %v1595 = vld [vmem:[#allocation8 + $0xa4] sm:$0xf]
    %v1596 = vld [vmem:[#allocation8 + $0xa8] sm:$0xf]
    %v1597 = vld [vmem:[#allocation8 + $0xac] sm:$0xf]
    %v1598 = vld [vmem:[#allocation8 + $0xb0] sm:$0xf]
    %v1599 = vld [vmem:[#allocation8 + $0xb4] sm:$0xf]
    %v1600 = vld [vmem:[#allocation8 + $0xb8] sm:$0xf]
    %v1601 = vld [vmem:[#allocation8 + $0xbc] sm:$0xf]
    %v1602 = vld [vmem:[#allocation8 + $0xc0] sm:$0xf]
    %v1603 = vld [vmem:[#allocation8 + $0xc4] sm:$0xf]
    %v1604 = vld [vmem:[#allocation8 + $0xc8] sm:$0xf]
    %v1605 = vld [vmem:[#allocation8 + $0xcc] sm:$0xf]
    %v1606 = vld [vmem:[#allocation8 + $0xd0] sm:$0xf]
    %v1607 = vld [vmem:[#allocation8 + $0xd4] sm:$0xf]
    %v1608 = vld [vmem:[#allocation8 + $0xd8] sm:$0xf]
    %v1609 = vld [vmem:[#allocation8 + $0xdc] sm:$0xf]
    %v1610 = vld [vmem:[#allocation8 + $0xe0] sm:$0xf]
    %v1611 = vld [vmem:[#allocation8 + $0xe4] sm:$0xf]
    %v1612 = vld [vmem:[#allocation8 + $0xe8] sm:$0xf]
    %v1613 = vld [vmem:[#allocation8 + $0xec] sm:$0xf]
    %v1614 = vld [vmem:[#allocation8 + $0xf0] sm:$0xf]
    %v1615 = vld [vmem:[#allocation8 + $0xf4] sm:$0xf]
    %v1616 = vld [vmem:[#allocation8 + $0xf8] sm:$0xf]
    %v1617 = vld [vmem:[#allocation8 + $0xfc] sm:$0xf]
    %v1682 = vunpack.c.l.b16 %v1554
    %v1683 = vunpack.c.l.b16 %v1555
    %v1684 = vunpack.c.l.b16 %v1556
    %v1685 = vunpack.c.l.b16 %v1557
    %v1686 = vunpack.c.l.b16 %v1558
    %v1687 = vunpack.c.l.b16 %v1559
    %v1688 = vunpack.c.l.b16 %v1560
    %v1689 = vunpack.c.l.b16 %v1561
    %v1690 = vunpack.c.l.b16 %v1562
    %v1691 = vunpack.c.l.b16 %v1563
    %v1692 = vunpack.c.l.b16 %v1564
    %v1693 = vunpack.c.l.b16 %v1565
    %v1694 = vunpack.c.l.b16 %v1566
    %v1695 = vunpack.c.l.b16 %v1567
    %v1696 = vunpack.c.l.b16 %v1568
    %v1697 = vunpack.c.l.b16 %v1569
    %v1698 = vunpack.c.l.b16 %v1570
    %v1699 = vunpack.c.l.b16 %v1571
    %v1700 = vunpack.c.l.b16 %v1572
    %v1701 = vunpack.c.l.b16 %v1573
    %v1702 = vunpack.c.l.b16 %v1574
    %v1703 = vunpack.c.l.b16 %v1575
    %v1704 = vunpack.c.l.b16 %v1576
    %v1705 = vunpack.c.l.b16 %v1577
    %v1706 = vunpack.c.l.b16 %v1578
    %v1707 = vunpack.c.l.b16 %v1579
    %v1708 = vunpack.c.l.b16 %v1580
    %v1709 = vunpack.c.l.b16 %v1581
    %v1710 = vunpack.c.l.b16 %v1582
    %v1711 = vunpack.c.l.b16 %v1583
    %v1712 = vunpack.c.l.b16 %v1584
    %v1713 = vunpack.c.l.b16 %v1585
    %v1714 = vunpack.c.l.b16 %v1586
    %v1715 = vunpack.c.l.b16 %v1587
    %v1716 = vunpack.c.l.b16 %v1588
    %v1717 = vunpack.c.l.b16 %v1589
    %v1718 = vunpack.c.l.b16 %v1590
    %v1719 = vunpack.c.l.b16 %v1591
    %v1720 = vunpack.c.l.b16 %v1592
    %v1721 = vunpack.c.l.b16 %v1593
    %v1722 = vunpack.c.l.b16 %v1594
    %v1723 = vunpack.c.l.b16 %v1595
    %v1724 = vunpack.c.l.b16 %v1596
    %v1725 = vunpack.c.l.b16 %v1597
    %v1726 = vunpack.c.l.b16 %v1598
    %v1727 = vunpack.c.l.b16 %v1599
    %v1728 = vunpack.c.l.b16 %v1600
    %v1729 = vunpack.c.l.b16 %v1601
    %v1730 = vunpack.c.l.b16 %v1602
    %v1731 = vunpack.c.l.b16 %v1603
    %v1732 = vunpack.c.l.b16 %v1604
    %v1733 = vunpack.c.l.b16 %v1605
    %v1734 = vunpack.c.l.b16 %v1606
    %v1735 = vunpack.c.l.b16 %v1607
    %v1736 = vunpack.c.l.b16 %v1608
    %v1737 = vunpack.c.l.b16 %v1609
    %v1738 = vunpack.c.l.b16 %v1610
    %v1739 = vunpack.c.l.b16 %v1611
    %v1740 = vunpack.c.l.b16 %v1612
    %v1741 = vunpack.c.l.b16 %v1613
    %v1742 = vunpack.c.l.b16 %v1614
    %v1743 = vunpack.c.l.b16 %v1615
    %v1744 = vunpack.c.l.b16 %v1616
    %v1745 = vunpack.c.l.b16 %v1617
    %v1746 = vpack.c.b16 %v1683, %v1682
    %v1747 = vpack.c.b16 %v1685, %v1684
    %v1748 = vpack.c.b16 %v1687, %v1686
    %v1749 = vpack.c.b16 %v1689, %v1688
    %v1750 = vpack.c.b16 %v1691, %v1690
    %v1751 = vpack.c.b16 %v1693, %v1692
    %v1752 = vpack.c.b16 %v1695, %v1694
    %v1753 = vpack.c.b16 %v1697, %v1696
    %v1754 = vpack.c.b16 %v1699, %v1698
    %v1755 = vpack.c.b16 %v1701, %v1700
    %v1756 = vpack.c.b16 %v1703, %v1702
    %v1757 = vpack.c.b16 %v1705, %v1704
    %v1758 = vpack.c.b16 %v1707, %v1706
    %v1759 = vpack.c.b16 %v1709, %v1708
    %v1760 = vpack.c.b16 %v1711, %v1710
    %v1761 = vpack.c.b16 %v1713, %v1712
    %v1762 = vpack.c.b16 %v1715, %v1714
    %v1763 = vpack.c.b16 %v1717, %v1716
    %v1764 = vpack.c.b16 %v1719, %v1718
    %v1765 = vpack.c.b16 %v1721, %v1720
    %v1766 = vpack.c.b16 %v1723, %v1722
    %v1767 = vpack.c.b16 %v1725, %v1724
    %v1768 = vpack.c.b16 %v1727, %v1726
    %v1769 = vpack.c.b16 %v1729, %v1728
    %v1770 = vpack.c.b16 %v1731, %v1730
    %v1771 = vpack.c.b16 %v1733, %v1732
    %v1772 = vpack.c.b16 %v1735, %v1734
    %v1773 = vpack.c.b16 %v1737, %v1736
    %v1774 = vpack.c.b16 %v1739, %v1738
    %v1775 = vpack.c.b16 %v1741, %v1740
    %v1776 = vpack.c.b16 %v1743, %v1742
    %v1777 = vpack.c.b16 %v1745, %v1744
    %1810 = vmatprep.subr.bf16.mxu0 0
    %1811 = vmatpush1.bf16.msra.mxu0 %v1746
    %1812 = vmatprep.subr.bf16.mxu0 0
    %1813 = vmatpush1.bf16.msra.mxu0 %v1747
    %1814 = vmatprep.subr.bf16.mxu0 0
    %1815 = vmatpush1.bf16.msra.mxu0 %v1748
    %1816 = vmatprep.subr.bf16.mxu0 0
    %1817 = vmatpush1.bf16.msra.mxu0 %v1749
    %1818 = vmatprep.subr.bf16.mxu0 0
    %1819 = vmatpush1.bf16.msra.mxu0 %v1750
    %1820 = vmatprep.subr.bf16.mxu0 0
    %1821 = vmatpush1.bf16.msra.mxu0 %v1751
    %1822 = vmatprep.subr.bf16.mxu0 0
    %1823 = vmatpush1.bf16.msra.mxu0 %v1752
    %1824 = vmatprep.subr.bf16.mxu0 0
    %1825 = vmatpush1.bf16.msra.mxu0 %v1753
    %1826 = vmatprep.subr.bf16.mxu0 0
    %1827 = vmatpush1.bf16.msra.mxu0 %v1754
    %1828 = vmatprep.subr.bf16.mxu0 0
    %1829 = vmatpush1.bf16.msra.mxu0 %v1755
    %1830 = vmatprep.subr.bf16.mxu0 0
    %1831 = vmatpush1.bf16.msra.mxu0 %v1756
    %1832 = vmatprep.subr.bf16.mxu0 0
    %1833 = vmatpush1.bf16.msra.mxu0 %v1757
    %1834 = vmatprep.subr.bf16.mxu0 0
    %1835 = vmatpush1.bf16.msra.mxu0 %v1758
    %1836 = vmatprep.subr.bf16.mxu0 0
    %1837 = vmatpush1.bf16.msra.mxu0 %v1759
    %1838 = vmatprep.subr.bf16.mxu0 0
    %1839 = vmatpush1.bf16.msra.mxu0 %v1760
    %1840 = vmatprep.subr.bf16.mxu0 0
    %1841 = vmatpush1.bf16.msra.mxu0 %v1761
    %1842 = vmatprep.mubr.bf16.mxu0 %v1551
    %1843 = vmatmul.mubr.bf16.gmra.mrb[0].mxu0 %v1550
    %v1844 = vpop.f32.mrb[0].mxu0
    %v1845 = vadd.f32 0.0, %v1844
    %v1846 = vpop.f32.mrb[0].mxu0
    %v1847 = vpop.f32.mrb[0].mxu0
    %v1848 = vadd.f32 0.0, %v1847
    %v1849 = vpop.f32.mrb[0].mxu0
    %1850 = vdwg.mxu0
    %1851 = vmatprep.subr.bf16.mxu0 0
    %1852 = vmatpush1.bf16.msra.mxu0 %v1762
    %1853 = vmatprep.subr.bf16.mxu0 0
    %1854 = vmatpush1.bf16.msra.mxu0 %v1763
    %1855 = vmatprep.subr.bf16.mxu0 0
    %1856 = vmatpush1.bf16.msra.mxu0 %v1764
    %1857 = vmatprep.subr.bf16.mxu0 0
    %1858 = vmatpush1.bf16.msra.mxu0 %v1765
    %1859 = vmatprep.subr.bf16.mxu0 0
    %1860 = vmatpush1.bf16.msra.mxu0 %v1766
    %1861 = vmatprep.subr.bf16.mxu0 0
    %1862 = vmatpush1.bf16.msra.mxu0 %v1767
    %1863 = vmatprep.subr.bf16.mxu0 0
    %1864 = vmatpush1.bf16.msra.mxu0 %v1768
    %1865 = vmatprep.subr.bf16.mxu0 0
    %1866 = vmatpush1.bf16.msra.mxu0 %v1769
    %1867 = vmatprep.subr.bf16.mxu0 0
    %1868 = vmatpush1.bf16.msra.mxu0 %v1770
    %1869 = vmatprep.subr.bf16.mxu0 0
    %1870 = vmatpush1.bf16.msra.mxu0 %v1771
    %1871 = vmatprep.subr.bf16.mxu0 0
    %1872 = vmatpush1.bf16.msra.mxu0 %v1772
    %1873 = vmatprep.subr.bf16.mxu0 0
    %1874 = vmatpush1.bf16.msra.mxu0 %v1773
    %1875 = vmatprep.subr.bf16.mxu0 0
    %1876 = vmatpush1.bf16.msra.mxu0 %v1774
    %1877 = vmatprep.subr.bf16.mxu0 0
    %1878 = vmatpush1.bf16.msra.mxu0 %v1775
    %1879 = vmatprep.subr.bf16.mxu0 0
    %1880 = vmatpush1.bf16.msra.mxu0 %v1776
    %1881 = vmatprep.subr.bf16.mxu0 0
    %1882 = vmatpush1.bf16.msra.mxu0 %v1777
    %1883 = vmatprep.mubr.bf16.mxu0 %v1553
    %1884 = vmatmul.mubr.bf16.gmra.mrb[0].mxu0 %v1552
    %v1885 = vpop.f32.mrb[0].mxu0
    %v1886 = vadd.f32 %v1845, %v1885
    %v1887 = vpop.f32.mrb[0].mxu0
    %v1888 = vpop.f32.mrb[0].mxu0
    %v1889 = vadd.f32 %v1848, %v1888
    %v1890 = vpop.f32.mrb[0].mxu0
    %1891 = vdwg.mxu0
    %1892 = vst [vmem:[#allocation10] sm:$0xff] %v1886
    %1893 = vst [vmem:[#allocation10 + $0x8] sm:$0xff] %v1889
    // Predicated region
    $region42: #{tpu_custom_call.1} parent=1 // pred_check
      _
    $region43: #{tpu_custom_call.1} parent=1 // pred_check_branch
      %1895 = sbr.rel (0) target = $region45
    $region44: #{tpu_custom_call.1} parent=1 // pred_region
      %s1897 = ssub.s32 256, 256
      %1898 = vsyncadd [#allocation4], %s1897
      %s1899 = sshll.u32 [#allocation10], 4
      %s1900 = int_to_ptr.vmem [resolvable:$true] %s1899
      %1905 = dma.vmem_to_hbm [thread:$0]  %s1900, 256, %s6, [#allocation4], 128, 128, 8
    $region45: #{tpu_custom_call.1} parent=1 // pred_fallthru
      _
    // Predicated region
    $region46: #{tpu_custom_call.1} parent=1 // pred_check
      _
    $region47: #{tpu_custom_call.1} parent=1 // pred_check_branch
      %1907 = sbr.rel (0) target = $region49
    $region48: #{tpu_custom_call.1} parent=1 // pred_region
      %1908 = dma.done [#allocation4], 256
    $region49: #{tpu_custom_call.1} parent=1 // pred_fallthru
      _
    %1909 = vsyncpa [#allocation3], 1
    %1910 = vsyncpa [#allocation6], 1
    %1911 = vsyncpa [#allocation9], 1
    %1912 = vsyncpa [#allocation4], 1

</llo_original>
